<compile_context>
chip_gen: v7x
topology: tpu7x:2x2x1
jax: 0.10.0
libtpu: 0.0.40
codegen_flags: <defaults>
</compile_context>

<pallas_src>
import jax
import jax.numpy as jnp
import numpy as np
from jax.experimental import pallas as pl
from jax.experimental.pallas import tpu as pltpu

# ---------------- static configuration (constructor arguments) ----------------
BATCH = 2
INPUT_LENGTH = 64          # I
INPUT_DEPTH = 4            # D
NUM_TASKS = 2              # T
NUM_STRANDS = 2            # S
NUM_DIL_LAYERS = 3
DIL_FILTER_SIZES = (3, 3, 3)
DIL_DILATIONS = (1, 2, 4)
DIL_DEPTH = 32
PROF_KERNEL = 11
TS = NUM_TASKS * NUM_STRANDS

LAST_SIZE = INPUT_LENGTH - sum(d * (k - 1) for d, k in zip(DIL_DILATIONS, DIL_FILTER_SIZES))  # 50
PROFILE_LENGTH = LAST_SIZE - (PROF_KERNEL - 1)                                                # 40
PADDINGS = tuple((d * (k - 1)) // 2 for d, k in zip(DIL_DILATIONS, DIL_FILTER_SIZES))
MAXPAD = max(PADDINGS)                                                                        # 4
CROP_START = (INPUT_LENGTH - LAST_SIZE) // 2                                                  # 7

# batch-packed-along-lanes layout
SEG = INPUT_LENGTH + 2 * MAXPAD          # 72: per-batch segment (pad | data | pad)
PACKED_W = BATCH * SEG                   # 144: packed activation width (output coords)
GW = PACKED_W + 2 * MAXPAD               # 152: staging-buffer width (extra margins)
PACKED_PW = (BATCH - 1) * SEG + PROFILE_LENGTH   # 112: packed profile-output width
PROF_TAP_OFF_CS = MAXPAD + CROP_START    # 11: first profile tap in cur_sum coordinates
OUT_COLS = 128
assert PACKED_PW + BATCH <= OUT_COLS
assert PROF_TAP_OFF_CS + (PROF_KERNEL - 1) + PACKED_PW <= PACKED_W  # taps stay inside cur_sum


# ------------------------------- Pallas kernel --------------------------------
def _bpnet_kernel(x_ref, mask_ref,
                  w0_ref, b0_ref, w1_ref, b1_ref, w2_ref, b2_ref,
                  wprof_ref, bprof_ref, wcnt_ref, bcnt_ref,
                  out_ref, pad_buf):
    # Zero the staging buffer ONCE; the pad margins/gaps stay zero for every layer.
    pad_buf[...] = jnp.zeros(pad_buf.shape, pad_buf.dtype)

    mask = mask_ref[...]                           # (1, PACKED_W): 1 on data cols, 0 on gaps

    dil_w = (w0_ref, w1_ref, w2_ref)
    dil_b = (b0_ref, b1_ref, b2_ref)

    # ---- dilated conv tower (one im2col matmul per layer) + residual running sum ----
    cur_sum = None
    for i in range(NUM_DIL_LAYERS):
        k_size = DIL_FILTER_SIZES[i]
        dil = DIL_DILATIONS[i]
        pad = PADDINGS[i]
        last = (i == NUM_DIL_LAYERS - 1)
        src = x_ref if i == 0 else pad_buf
        taps = [src[:, MAXPAD - pad + k * dil: MAXPAD - pad + k * dil + PACKED_W]
                for k in range(k_size)]
        im2col = jnp.concatenate(taps, axis=0)                     # (C_in*K, PACKED_W)
        out = jnp.dot(dil_w[i][...], im2col,
                      preferred_element_type=jnp.float32)          # (DIL_DEPTH, PACKED_W)
        out = jnp.maximum(out + dil_b[i][...], 0.0)                # bias + ReLU
        if not last:
            # Gap columns must stay zero only if a later conv layer reads them.
            out = out * mask
        cur_sum = out if cur_sum is None else cur_sum + out        # residual running sum
        if not last:
            # Stage for the next layer's dilated taps (needs the zero margins).
            pad_buf[:, MAXPAD:MAXPAD + PACKED_W] = cur_sum

    # ---- profile head: crop + large conv + grouped 1x1 as ONE fused matmul ----
    # Taps are read straight from the final residual sum (no writeback needed):
    # every tap column for a kept profile position lies inside that batch's valid
    # data range, so neither the margins nor the gap columns are ever touched.
    ptaps = [cur_sum[:, PROF_TAP_OFF_CS + k: PROF_TAP_OFF_CS + k + PACKED_PW]
             for k in range(PROF_KERNEL)]
    p_im2col = jnp.concatenate(ptaps, axis=0)                      # (DIL_DEPTH*Kp, PACKED_PW)
    prof = jnp.dot(wprof_ref[...], p_im2col,
                   preferred_element_type=jnp.float32) + bprof_ref[...]   # (TS, PACKED_PW)

    # ---- count head: W @ mean(crop) == mean(W @ crop); lane-dense matmul first ----
    y = jnp.dot(wcnt_ref[...], cur_sum, preferred_element_type=jnp.float32)  # (TS, PACKED_W)
    csums = []
    for b in range(BATCH):
        lo = b * SEG + MAXPAD + CROP_START
        csums.append(jnp.sum(y[:, lo:lo + LAST_SIZE], axis=1, keepdims=True))
    counts = jnp.concatenate(csums, axis=1) * (1.0 / LAST_SIZE) + bcnt_ref[...]  # (TS, BATCH)

    # ---- single lane-dense (8, 128) output slab: [profiles | counts | zero tail] ----
    tail = jnp.zeros((TS, OUT_COLS - PACKED_PW - BATCH), jnp.float32)
    row = jnp.concatenate([prof, counts, tail], axis=1)            # (TS, 128)
    fill = jnp.zeros((8 - TS, OUT_COLS), jnp.float32)
    out_ref[...] = jnp.concatenate([row, fill], axis=0)            # (8, 128) unmasked store


# ------------------------------ parameter setup --------------------------------
def init_params(key):
    n_keys = 2 * NUM_DIL_LAYERS + 8
    keys = jax.random.split(key, n_keys)
    ki = 0
    params = {"dil": []}
    for i in range(NUM_DIL_LAYERS):
        c_in = INPUT_DEPTH if i == 0 else DIL_DEPTH
        w = 0.1 * jax.random.normal(keys[ki], (DIL_DEPTH, c_in, DIL_FILTER_SIZES[i]), jnp.float32)
        b = 0.1 * jax.random.normal(keys[ki + 1], (DIL_DEPTH,), jnp.float32)
        ki += 2
        params["dil"].append((w, b))
    params["prof_large_w"] = 0.1 * jax.random.normal(keys[ki], (TS, DIL_DEPTH, PROF_KERNEL), jnp.float32); ki += 1
    params["prof_large_b"] = 0.1 * jax.random.normal(keys[ki], (TS,), jnp.float32); ki += 1
    params["prof_one_w"] = 0.1 * jax.random.normal(keys[ki], (TS, NUM_STRANDS, 1), jnp.float32); ki += 1
    params["prof_one_b"] = 0.1 * jax.random.normal(keys[ki], (TS,), jnp.float32); ki += 1
    params["count_dense_w"] = 0.1 * jax.random.normal(keys[ki], (TS, DIL_DEPTH), jnp.float32); ki += 1
    params["count_dense_b"] = 0.1 * jax.random.normal(keys[ki], (TS,), jnp.float32); ki += 1
    params["count_one_w"] = 0.1 * jax.random.normal(keys[ki], (TS, NUM_STRANDS, 1), jnp.float32); ki += 1
    params["count_one_b"] = 0.1 * jax.random.normal(keys[ki], (TS,), jnp.float32); ki += 1
    return params


def grouped_to_dense(w2d, num_groups):
    """(C_out, C_in_per_group) grouped 1x1 conv weight -> (C_out, C_out) block-diag."""
    c_out, cg = w2d.shape
    opg = c_out // num_groups
    dense = jnp.zeros((c_out, c_out), w2d.dtype)
    for g in range(num_groups):
        dense = dense.at[g * opg:(g + 1) * opg, g * cg:(g + 1) * cg].set(
            w2d[g * opg:(g + 1) * opg])
    return dense


def _mm_hi(a, b):
    # exact-ish f32 matmul for wrapper-side weight fusion (avoid bf16 demotion)
    return jnp.matmul(a, b, precision=jax.lax.Precision.HIGHEST)


# ---------------------------------- wrapper ------------------------------------
@jax.jit
def forward(x, params):
    """x: (B, I, D) float32 -> (prof_pred (B,T,O,S), count_pred (B,T,S))."""
    xc = jnp.transpose(x, (0, 2, 1)).astype(jnp.float32)          # (B, D, L)  (NCW)

    # Batch packed along lanes with 2*MAXPAD zero gaps: [gap | x0 | gap | x1 | gap]
    zgap = jnp.zeros((INPUT_DEPTH, 2 * MAXPAD), jnp.float32)
    pieces = []
    for b in range(BATCH):
        pieces += [zgap, xc[b]]
    pieces.append(zgap)
    x_packed = jnp.concatenate(pieces, axis=1)                    # (D, GW)

    # Valid-column mask over the packed output coordinates.
    pos = np.arange(PACKED_W)
    valid = ((pos % SEG) >= MAXPAD) & ((pos % SEG) < MAXPAD + INPUT_LENGTH)
    mask = jnp.asarray(valid.astype(np.float32)).reshape(1, PACKED_W)

    inputs = [x_packed, mask]
    in_specs = [pl.BlockSpec((INPUT_DEPTH, GW), lambda i: (0, 0)),
                pl.BlockSpec((1, PACKED_W), lambda i: (0, 0))]

    # im2col-flattened dilated conv weights: (C_out, K*C_in), tap-major column order.
    for (w, b) in params["dil"]:
        wf = jnp.transpose(w, (0, 2, 1)).reshape(DIL_DEPTH, -1)
        bf = b.reshape(DIL_DEPTH, 1)
        inputs += [wf, bf]
        in_specs += [pl.BlockSpec(wf.shape, lambda i: (0, 0)),
                     pl.BlockSpec((DIL_DEPTH, 1), lambda i: (0, 0))]

    # Fuse the grouped 1x1 convs into the preceding dense maps (exact linear algebra).
    wpo = grouped_to_dense(params["prof_one_w"][:, :, 0], NUM_TASKS)             # (TS, TS)
    wp_flat = jnp.transpose(params["prof_large_w"], (0, 2, 1)).reshape(TS, -1)   # (TS, Kp*C)
    w_prof = _mm_hi(wpo, wp_flat)                                                # (TS, 352)
    b_prof = _mm_hi(wpo, params["prof_large_b"].reshape(TS, 1)) \
        + params["prof_one_b"].reshape(TS, 1)

    wco = grouped_to_dense(params["count_one_w"][:, :, 0], NUM_TASKS)
    w_cnt = _mm_hi(wco, params["count_dense_w"])                                 # (TS, 32)
    b_cnt = _mm_hi(wco, params["count_dense_b"].reshape(TS, 1)) \
        + params["count_one_b"].reshape(TS, 1)

    inputs += [w_prof, b_prof, w_cnt, b_cnt]
    in_specs += [pl.BlockSpec(w_prof.shape, lambda i: (0, 0)),
                 pl.BlockSpec((TS, 1), lambda i: (0, 0)),
                 pl.BlockSpec((TS, DIL_DEPTH), lambda i: (0, 0)),
                 pl.BlockSpec((TS, 1), lambda i: (0, 0))]

    slab = pl.pallas_call(
        _bpnet_kernel,
        out_shape=jax.ShapeDtypeStruct((8, OUT_COLS), jnp.float32),
        grid_spec=pltpu.PrefetchScalarGridSpec(
            num_scalar_prefetch=0,
            grid=(1,),
            in_specs=in_specs,
            out_specs=pl.BlockSpec((8, OUT_COLS), lambda i: (0, 0)),
            scratch_shapes=[pltpu.VMEM((DIL_DEPTH, GW), jnp.float32)]),
        compiler_params=pltpu.CompilerParams(dimension_semantics=("arbitrary",)),
    )(*inputs)

    # ---- unpack the lane-dense slab (pure layout glue) ----
    prof_packed = slab[:TS, :PACKED_PW]                            # (TS, 112)
    prof_per_b = [prof_packed[:, b * SEG: b * SEG + PROFILE_LENGTH] for b in range(BATCH)]
    prof_flat = jnp.stack(prof_per_b, axis=0)                      # (B, TS, O)
    prof_pred = prof_flat.reshape(BATCH, NUM_TASKS, NUM_STRANDS,
                                  PROFILE_LENGTH).transpose(0, 1, 3, 2)
    counts = slab[:TS, PACKED_PW:PACKED_PW + BATCH]                # (TS, B)
    count_pred = counts.T.reshape(BATCH, NUM_TASKS, NUM_STRANDS)
    return prof_pred, count_pred


# ------------------------------ pure-JAX reference ------------------------------
def reference_forward(x, params):
    xc = jnp.transpose(x, (0, 2, 1)).astype(jnp.float32)
    dil_sum = 0.0
    out = None
    for i, (w, b) in enumerate(params["dil"]):
        inp = xc if i == 0 else dil_sum
        out = jax.lax.conv_general_dilated(
            inp, w, window_strides=(1,), padding=[(PADDINGS[i], PADDINGS[i])],
            rhs_dilation=(DIL_DILATIONS[i],),
            dimension_numbers=("NCH", "OIH", "NCH")) + b[None, :, None]
        out = jax.nn.relu(out)
        dil_sum = out + dil_sum
    start = (out.shape[2] - LAST_SIZE) // 2
    cut = dil_sum[:, :, start:start + LAST_SIZE]
    p = jax.lax.conv_general_dilated(cut, params["prof_large_w"], (1,), [(0, 0)],
                                     dimension_numbers=("NCH", "OIH", "NCH")) \
        + params["prof_large_b"][None, :, None]
    p1 = jax.lax.conv_general_dilated(p, params["prof_one_w"], (1,), [(0, 0)],
                                      feature_group_count=NUM_TASKS,
                                      dimension_numbers=("NCH", "OIH", "NCH")) \
        + params["prof_one_b"][None, :, None]
    prof_pred = p1.reshape(x.shape[0], NUM_TASKS, NUM_STRANDS, -1).transpose(0, 1, 3, 2)
    pooled = jnp.mean(cut, axis=2)
    cd = pooled @ params["count_dense_w"].T + params["count_dense_b"]
    cd = cd.reshape(x.shape[0], TS, 1)
    cc = jax.lax.conv_general_dilated(cd, params["count_one_w"], (1,), [(0, 0)],
                                      feature_group_count=NUM_TASKS,
                                      dimension_numbers=("NCH", "OIH", "NCH")) \
        + params["count_one_b"][None, :, None]
    count_pred = cc.reshape(x.shape[0], NUM_TASKS, NUM_STRANDS)
    return prof_pred, count_pred


if __name__ == "__main__":
    key = jax.random.PRNGKey(0)
    kx, kp = jax.random.split(key)
    x = jax.random.normal(kx, (BATCH, INPUT_LENGTH, INPUT_DEPTH), jnp.float32)
    params = init_params(kp)

    prof, count = forward(x, params)
    jax.block_until_ready((prof, count))

    ref_prof, ref_count = reference_forward(x, params)
    np.testing.assert_allclose(np.asarray(prof), np.asarray(ref_prof), rtol=2e-4, atol=2e-4)
    np.testing.assert_allclose(np.asarray(count), np.asarray(ref_count), rtol=2e-4, atol=2e-4)
    assert prof.shape == (BATCH, NUM_TASKS, PROFILE_LENGTH, NUM_STRANDS)
    assert count.shape == (BATCH, NUM_TASKS, NUM_STRANDS)
    print("KERNEL_OK")
</pallas_src>

<mosaic_0001>
module attributes {stable_mosaic.version = 11 : i64} {
  func.func @_bpnet_kernel(%arg0: i32, %arg1: memref<4x152xf32, #tpu.memory_space<vmem>>, %arg2: memref<1x144xf32, #tpu.memory_space<vmem>>, %arg3: memref<32x12xf32, #tpu.memory_space<vmem>>, %arg4: memref<32x1xf32, #tpu.memory_space<vmem>>, %arg5: memref<32x96xf32, #tpu.memory_space<vmem>>, %arg6: memref<32x1xf32, #tpu.memory_space<vmem>>, %arg7: memref<32x96xf32, #tpu.memory_space<vmem>>, %arg8: memref<32x1xf32, #tpu.memory_space<vmem>>, %arg9: memref<4x352xf32, #tpu.memory_space<vmem>>, %arg10: memref<4x1xf32, #tpu.memory_space<vmem>>, %arg11: memref<4x32xf32, #tpu.memory_space<vmem>>, %arg12: memref<4x1xf32, #tpu.memory_space<vmem>>, %arg13: memref<8x128xf32, #tpu.memory_space<vmem>>, %arg14: memref<32x152xf32, #tpu.memory_space<vmem>>) attributes {dimension_semantics = [#tpu.dimension_semantics<arbitrary>], iteration_bounds = array<i64: 1>, scalar_prefetch = 0 : i64, scratch_operands = 1 : i64, tpu.core_type = #tpu.core_type<tc>, window_params = [{pipeline_mode = #tpu.pipeline_mode<synchronous>, transform_indices = @transform_0, window_bounds = array<i64: 4, 152>}, {pipeline_mode = #tpu.pipeline_mode<synchronous>, transform_indices = @transform_1, window_bounds = array<i64: 1, 144>}, {pipeline_mode = #tpu.pipeline_mode<synchronous>, transform_indices = @transform_2, window_bounds = array<i64: 32, 12>}, {pipeline_mode = #tpu.pipeline_mode<synchronous>, transform_indices = @transform_3, window_bounds = array<i64: 32, 1>}, {pipeline_mode = #tpu.pipeline_mode<synchronous>, transform_indices = @transform_4, window_bounds = array<i64: 32, 96>}, {pipeline_mode = #tpu.pipeline_mode<synchronous>, transform_indices = @transform_5, window_bounds = array<i64: 32, 1>}, {pipeline_mode = #tpu.pipeline_mode<synchronous>, transform_indices = @transform_6, window_bounds = array<i64: 32, 96>}, {pipeline_mode = #tpu.pipeline_mode<synchronous>, transform_indices = @transform_7, window_bounds = array<i64: 32, 1>}, {pipeline_mode = #tpu.pipeline_mode<synchronous>, transform_indices = @transform_8, window_bounds = array<i64: 4, 352>}, {pipeline_mode = #tpu.pipeline_mode<synchronous>, transform_indices = @transform_9, window_bounds = array<i64: 4, 1>}, {pipeline_mode = #tpu.pipeline_mode<synchronous>, transform_indices = @transform_10, window_bounds = array<i64: 4, 32>}, {pipeline_mode = #tpu.pipeline_mode<synchronous>, transform_indices = @transform_11, window_bounds = array<i64: 4, 1>}, {pipeline_mode = #tpu.pipeline_mode<synchronous>, transform_indices = @transform_12, window_bounds = array<i64: 8, 128>}]} {
    %cst = arith.constant 0.000000e+00 : f32
    %0 = vector.broadcast %cst : f32 to vector<32x152xf32>
    %c0 = arith.constant 0 : index
    %c0_0 = arith.constant 0 : index
    %1 = vector.load %arg14[%c0, %c0_0] : memref<32x152xf32, #tpu.memory_space<vmem>>, vector<32x152xf32>
    tpu.vector_store %arg14[%c0, %c0_0], %0 {strides = array<i32>} : memref<32x152xf32, #tpu.memory_space<vmem>>, vector<32x152xf32>,
    %c0_1 = arith.constant 0 : index
    %c0_2 = arith.constant 0 : index
    %2 = vector.load %arg2[%c0_1, %c0_2] : memref<1x144xf32, #tpu.memory_space<vmem>>, vector<1x144xf32>
    %c0_3 = arith.constant 0 : index
    %c3 = arith.constant 3 : index
    %3 = vector.load %arg1[%c0_3, %c3] : memref<4x152xf32, #tpu.memory_space<vmem>>, vector<4x144xf32>
    %c0_4 = arith.constant 0 : index
    %c4 = arith.constant 4 : index
    %4 = vector.load %arg1[%c0_4, %c4] : memref<4x152xf32, #tpu.memory_space<vmem>>, vector<4x144xf32>
    %c0_5 = arith.constant 0 : index
    %c5 = arith.constant 5 : index
    %5 = vector.load %arg1[%c0_5, %c5] : memref<4x152xf32, #tpu.memory_space<vmem>>, vector<4x144xf32>
    %6 = tpu.concatenate %3, %4, %5 in 0 : vector<4x144xf32>, vector<4x144xf32>, vector<4x144xf32> -> vector<12x144xf32>
    %c0_6 = arith.constant 0 : index
    %c0_7 = arith.constant 0 : index
    %7 = vector.load %arg3[%c0_6, %c0_7] : memref<32x12xf32, #tpu.memory_space<vmem>>, vector<32x12xf32>
    %cst_8 = arith.constant dense<0.000000e+00> : vector<32x144xf32>
    %8 = tpu.matmul %7, %6, %cst_8 {dimension_numbers = #tpu.dot_dimension_numbers<[1], [0], [0], [1], [0, 0, 1, 1], [], []>} : vector<32x12xf32>, vector<12x144xf32>, vector<32x144xf32> -> vector<32x144xf32>
    %c0_9 = arith.constant 0 : index
    %c0_10 = arith.constant 0 : index
    %9 = vector.load %arg4[%c0_9, %c0_10] : memref<32x1xf32, #tpu.memory_space<vmem>>, vector<32x1xf32>
    %10 = vector.broadcast %9 : vector<32x1xf32> to vector<32x144xf32>
    %11 = arith.addf %8, %10 : vector<32x144xf32>
    %cst_11 = arith.constant 0.000000e+00 : f32
    %12 = vector.broadcast %cst_11 : f32 to vector<32x144xf32>
    %13 = arith.maximumf %11, %12 : vector<32x144xf32>
    %14 = vector.broadcast %2 : vector<1x144xf32> to vector<32x144xf32>
    %15 = arith.mulf %13, %14 : vector<32x144xf32>
    %c0_12 = arith.constant 0 : index
    %c4_13 = arith.constant 4 : index
    %16 = vector.load %arg14[%c0_12, %c4_13] : memref<32x152xf32, #tpu.memory_space<vmem>>, vector<32x144xf32>
    tpu.vector_store %arg14[%c0_12, %c4_13], %15 {strides = array<i32>} : memref<32x152xf32, #tpu.memory_space<vmem>>, vector<32x144xf32>,
    %c0_14 = arith.constant 0 : index
    %c2 = arith.constant 2 : index
    %17 = vector.load %arg14[%c0_14, %c2] : memref<32x152xf32, #tpu.memory_space<vmem>>, vector<32x144xf32>
    %c0_15 = arith.constant 0 : index
    %c4_16 = arith.constant 4 : index
    %18 = vector.load %arg14[%c0_15, %c4_16] : memref<32x152xf32, #tpu.memory_space<vmem>>, vector<32x144xf32>
    %c0_17 = arith.constant 0 : index
    %c6 = arith.constant 6 : index
    %19 = vector.load %arg14[%c0_17, %c6] : memref<32x152xf32, #tpu.memory_space<vmem>>, vector<32x144xf32>
    %20 = tpu.concatenate %17, %18, %19 in 0 : vector<32x144xf32>, vector<32x144xf32>, vector<32x144xf32> -> vector<96x144xf32>
    %c0_18 = arith.constant 0 : index
    %c0_19 = arith.constant 0 : index
    %21 = vector.load %arg5[%c0_18, %c0_19] : memref<32x96xf32, #tpu.memory_space<vmem>>, vector<32x96xf32>
    %cst_20 = arith.constant dense<0.000000e+00> : vector<32x144xf32>
    %22 = tpu.matmul %21, %20, %cst_20 {dimension_numbers = #tpu.dot_dimension_numbers<[1], [0], [0], [1], [0, 0, 1, 1], [], []>} : vector<32x96xf32>, vector<96x144xf32>, vector<32x144xf32> -> vector<32x144xf32>
    %c0_21 = arith.constant 0 : index
    %c0_22 = arith.constant 0 : index
    %23 = vector.load %arg6[%c0_21, %c0_22] : memref<32x1xf32, #tpu.memory_space<vmem>>, vector<32x1xf32>
    %24 = vector.broadcast %23 : vector<32x1xf32> to vector<32x144xf32>
    %25 = arith.addf %22, %24 : vector<32x144xf32>
    %cst_23 = arith.constant 0.000000e+00 : f32
    %26 = vector.broadcast %cst_23 : f32 to vector<32x144xf32>
    %27 = arith.maximumf %25, %26 : vector<32x144xf32>
    %28 = vector.broadcast %2 : vector<1x144xf32> to vector<32x144xf32>
    %29 = arith.mulf %27, %28 : vector<32x144xf32>
    %30 = arith.addf %15, %29 : vector<32x144xf32>
    %c0_24 = arith.constant 0 : index
    %c4_25 = arith.constant 4 : index
    %31 = vector.load %arg14[%c0_24, %c4_25] : memref<32x152xf32, #tpu.memory_space<vmem>>, vector<32x144xf32>
    tpu.vector_store %arg14[%c0_24, %c4_25], %30 {strides = array<i32>} : memref<32x152xf32, #tpu.memory_space<vmem>>, vector<32x144xf32>,
    %c0_26 = arith.constant 0 : index
    %c0_27 = arith.constant 0 : index
    %32 = vector.load %arg14[%c0_26, %c0_27] : memref<32x152xf32, #tpu.memory_space<vmem>>, vector<32x144xf32>
    %c0_28 = arith.constant 0 : index
    %c4_29 = arith.constant 4 : index
    %33 = vector.load %arg14[%c0_28, %c4_29] : memref<32x152xf32, #tpu.memory_space<vmem>>, vector<32x144xf32>
    %c0_30 = arith.constant 0 : index
    %c8 = arith.constant 8 : index
    %34 = vector.load %arg14[%c0_30, %c8] : memref<32x152xf32, #tpu.memory_space<vmem>>, vector<32x144xf32>
    %35 = tpu.concatenate %32, %33, %34 in 0 : vector<32x144xf32>, vector<32x144xf32>, vector<32x144xf32> -> vector<96x144xf32>
    %c0_31 = arith.constant 0 : index
    %c0_32 = arith.constant 0 : index
    %36 = vector.load %arg7[%c0_31, %c0_32] : memref<32x96xf32, #tpu.memory_space<vmem>>, vector<32x96xf32>
    %cst_33 = arith.constant dense<0.000000e+00> : vector<32x144xf32>
    %37 = tpu.matmul %36, %35, %cst_33 {dimension_numbers = #tpu.dot_dimension_numbers<[1], [0], [0], [1], [0, 0, 1, 1], [], []>} : vector<32x96xf32>, vector<96x144xf32>, vector<32x144xf32> -> vector<32x144xf32>
    %c0_34 = arith.constant 0 : index
    %c0_35 = arith.constant 0 : index
    %38 = vector.load %arg8[%c0_34, %c0_35] : memref<32x1xf32, #tpu.memory_space<vmem>>, vector<32x1xf32>
    %39 = vector.broadcast %38 : vector<32x1xf32> to vector<32x144xf32>
    %40 = arith.addf %37, %39 : vector<32x144xf32>
    %cst_36 = arith.constant 0.000000e+00 : f32
    %41 = vector.broadcast %cst_36 : f32 to vector<32x144xf32>
    %42 = arith.maximumf %40, %41 : vector<32x144xf32>
    %43 = arith.addf %30, %42 : vector<32x144xf32>
    %44 = vector.extract_strided_slice %43 {offsets = [0, 11], sizes = [32, 112], strides = [1, 1]} : vector<32x144xf32> to vector<32x112xf32>
    %45 = vector.extract_strided_slice %43 {offsets = [0, 12], sizes = [32, 112], strides = [1, 1]} : vector<32x144xf32> to vector<32x112xf32>
    %46 = vector.extract_strided_slice %43 {offsets = [0, 13], sizes = [32, 112], strides = [1, 1]} : vector<32x144xf32> to vector<32x112xf32>
    %47 = vector.extract_strided_slice %43 {offsets = [0, 14], sizes = [32, 112], strides = [1, 1]} : vector<32x144xf32> to vector<32x112xf32>
    %48 = vector.extract_strided_slice %43 {offsets = [0, 15], sizes = [32, 112], strides = [1, 1]} : vector<32x144xf32> to vector<32x112xf32>
    %49 = vector.extract_strided_slice %43 {offsets = [0, 16], sizes = [32, 112], strides = [1, 1]} : vector<32x144xf32> to vector<32x112xf32>
    %50 = vector.extract_strided_slice %43 {offsets = [0, 17], sizes = [32, 112], strides = [1, 1]} : vector<32x144xf32> to vector<32x112xf32>
    %51 = vector.extract_strided_slice %43 {offsets = [0, 18], sizes = [32, 112], strides = [1, 1]} : vector<32x144xf32> to vector<32x112xf32>
    %52 = vector.extract_strided_slice %43 {offsets = [0, 19], sizes = [32, 112], strides = [1, 1]} : vector<32x144xf32> to vector<32x112xf32>
    %53 = vector.extract_strided_slice %43 {offsets = [0, 20], sizes = [32, 112], strides = [1, 1]} : vector<32x144xf32> to vector<32x112xf32>
    %54 = vector.extract_strided_slice %43 {offsets = [0, 21], sizes = [32, 112], strides = [1, 1]} : vector<32x144xf32> to vector<32x112xf32>
    %55 = tpu.concatenate %44, %45, %46, %47, %48, %49, %50, %51, %52, %53, %54 in 0 : vector<32x112xf32>, vector<32x112xf32>, vector<32x112xf32>, vector<32x112xf32>, vector<32x112xf32>, vector<32x112xf32>, vector<32x112xf32>, vector<32x112xf32>, vector<32x112xf32>, vector<32x112xf32>, vector<32x112xf32> -> vector<352x112xf32>
    %c0_37 = arith.constant 0 : index
    %c0_38 = arith.constant 0 : index
    %56 = vector.load %arg9[%c0_37, %c0_38] : memref<4x352xf32, #tpu.memory_space<vmem>>, vector<4x352xf32>
    %cst_39 = arith.constant dense<0.000000e+00> : vector<4x112xf32>
    %57 = tpu.matmul %56, %55, %cst_39 {dimension_numbers = #tpu.dot_dimension_numbers<[1], [0], [0], [1], [0, 0, 1, 1], [], []>} : vector<4x352xf32>, vector<352x112xf32>, vector<4x112xf32> -> vector<4x112xf32>
    %c0_40 = arith.constant 0 : index
    %c0_41 = arith.constant 0 : index
    %58 = vector.load %arg10[%c0_40, %c0_41] : memref<4x1xf32, #tpu.memory_space<vmem>>, vector<4x1xf32>
    %59 = vector.broadcast %58 : vector<4x1xf32> to vector<4x112xf32>
    %60 = arith.addf %57, %59 : vector<4x112xf32>
    %c0_42 = arith.constant 0 : index
    %c0_43 = arith.constant 0 : index
    %61 = vector.load %arg11[%c0_42, %c0_43] : memref<4x32xf32, #tpu.memory_space<vmem>>, vector<4x32xf32>
    %cst_44 = arith.constant dense<0.000000e+00> : vector<4x144xf32>
    %62 = tpu.matmul %61, %43, %cst_44 {dimension_numbers = #tpu.dot_dimension_numbers<[1], [0], [0], [1], [0, 0, 1, 1], [], []>} : vector<4x32xf32>, vector<32x144xf32>, vector<4x144xf32> -> vector<4x144xf32>
    %63 = vector.extract_strided_slice %62 {offsets = [0, 11], sizes = [4, 50], strides = [1, 1]} : vector<4x144xf32> to vector<4x50xf32>
    %cst_45 = arith.constant dense<0.000000e+00> : vector<4xf32>
    %64 = vector.multi_reduction <add>, %63, %cst_45 [1] : vector<4x50xf32> to vector<4xf32>
    %65 = vector.shape_cast %64 : vector<4xf32> to vector<4x1xf32>
    %66 = vector.extract_strided_slice %62 {offsets = [0, 83], sizes = [4, 50], strides = [1, 1]} : vector<4x144xf32> to vector<4x50xf32>
    %cst_46 = arith.constant dense<0.000000e+00> : vector<4xf32>
    %67 = vector.multi_reduction <add>, %66, %cst_46 [1] : vector<4x50xf32> to vector<4xf32>
    %68 = vector.shape_cast %67 : vector<4xf32> to vector<4x1xf32>
    %69 = tpu.concatenate %65, %68 in 1 : vector<4x1xf32>, vector<4x1xf32> -> vector<4x2xf32>
    %cst_47 = arith.constant 2.000000e-02 : f32
    %70 = vector.broadcast %cst_47 : f32 to vector<4x2xf32>
    %71 = arith.mulf %69, %70 : vector<4x2xf32>
    %c0_48 = arith.constant 0 : index
    %c0_49 = arith.constant 0 : index
    %72 = vector.load %arg12[%c0_48, %c0_49] : memref<4x1xf32, #tpu.memory_space<vmem>>, vector<4x1xf32>
    %73 = vector.broadcast %72 : vector<4x1xf32> to vector<4x2xf32>
    %74 = arith.addf %71, %73 : vector<4x2xf32>
    %cst_50 = arith.constant 0.000000e+00 : f32
    %75 = vector.broadcast %cst_50 : f32 to vector<4x14xf32>
    %76 = tpu.concatenate %60, %74, %75 in 1 : vector<4x112xf32>, vector<4x2xf32>, vector<4x14xf32> -> vector<4x128xf32>
    %cst_51 = arith.constant 0.000000e+00 : f32
    %77 = vector.broadcast %cst_51 : f32 to vector<4x128xf32>
    %78 = tpu.concatenate %76, %77 in 0 : vector<4x128xf32>, vector<4x128xf32> -> vector<8x128xf32>
    %c0_52 = arith.constant 0 : index
    %c0_53 = arith.constant 0 : index
    %79 = vector.load %arg13[%c0_52, %c0_53] : memref<8x128xf32, #tpu.memory_space<vmem>>, vector<8x128xf32>
    tpu.vector_store %arg13[%c0_52, %c0_53], %78 {strides = array<i32>} : memref<8x128xf32, #tpu.memory_space<vmem>>, vector<8x128xf32>,
    return
  }
  func.func @transform_0(%arg0: i32) -> (i32, i32) {
    %c0_i32 = arith.constant 0 : i32
    %c0_i32_0 = arith.constant 0 : i32
    %c0_i32_1 = arith.constant 0 : i32
    return %c0_i32, %c0_i32_0 : i32, i32
  }
  func.func @transform_1(%arg0: i32) -> (i32, i32) {
    %c0_i32 = arith.constant 0 : i32
    %c0_i32_0 = arith.constant 0 : i32
    %c0_i32_1 = arith.constant 0 : i32
    return %c0_i32, %c0_i32_0 : i32, i32
  }
  func.func @transform_2(%arg0: i32) -> (i32, i32) {
    %c0_i32 = arith.constant 0 : i32
    %c0_i32_0 = arith.constant 0 : i32
    %c0_i32_1 = arith.constant 0 : i32
    return %c0_i32, %c0_i32_0 : i32, i32
  }
  func.func @transform_3(%arg0: i32) -> (i32, i32) {
    %c0_i32 = arith.constant 0 : i32
    %c0_i32_0 = arith.constant 0 : i32
    %c0_i32_1 = arith.constant 0 : i32
    return %c0_i32, %c0_i32_0 : i32, i32
  }
  func.func @transform_4(%arg0: i32) -> (i32, i32) {
    %c0_i32 = arith.constant 0 : i32
    %c0_i32_0 = arith.constant 0 : i32
    %c0_i32_1 = arith.constant 0 : i32
    return %c0_i32, %c0_i32_0 : i32, i32
  }
  func.func @transform_5(%arg0: i32) -> (i32, i32) {
    %c0_i32 = arith.constant 0 : i32
    %c0_i32_0 = arith.constant 0 : i32
    %c0_i32_1 = arith.constant 0 : i32
    return %c0_i32, %c0_i32_0 : i32, i32
  }
  func.func @transform_6(%arg0: i32) -> (i32, i32) {
    %c0_i32 = arith.constant 0 : i32
    %c0_i32_0 = arith.constant 0 : i32
    %c0_i32_1 = arith.constant 0 : i32
    return %c0_i32, %c0_i32_0 : i32, i32
  }
  func.func @transform_7(%arg0: i32) -> (i32, i32) {
    %c0_i32 = arith.constant 0 : i32
    %c0_i32_0 = arith.constant 0 : i32
    %c0_i32_1 = arith.constant 0 : i32
    return %c0_i32, %c0_i32_0 : i32, i32
  }
  func.func @transform_8(%arg0: i32) -> (i32, i32) {
    %c0_i32 = arith.constant 0 : i32
    %c0_i32_0 = arith.constant 0 : i32
    %c0_i32_1 = arith.constant 0 : i32
    return %c0_i32, %c0_i32_0 : i32, i32
  }
  func.func @transform_9(%arg0: i32) -> (i32, i32) {
    %c0_i32 = arith.constant 0 : i32
    %c0_i32_0 = arith.constant 0 : i32
    %c0_i32_1 = arith.constant 0 : i32
    return %c0_i32, %c0_i32_0 : i32, i32
  }
  func.func @transform_10(%arg0: i32) -> (i32, i32) {
    %c0_i32 = arith.constant 0 : i32
    %c0_i32_0 = arith.constant 0 : i32
    %c0_i32_1 = arith.constant 0 : i32
    return %c0_i32, %c0_i32_0 : i32, i32
  }
  func.func @transform_11(%arg0: i32) -> (i32, i32) {
    %c0_i32 = arith.constant 0 : i32
    %c0_i32_0 = arith.constant 0 : i32
    %c0_i32_1 = arith.constant 0 : i32
    return %c0_i32, %c0_i32_0 : i32, i32
  }
  func.func @transform_12(%arg0: i32) -> (i32, i32) {
    %c0_i32 = arith.constant 0 : i32
    %c0_i32_0 = arith.constant 0 : i32
    %c0_i32_1 = arith.constant 0 : i32
    return %c0_i32, %c0_i32_0 : i32, i32
  }
}

</mosaic_0001>

<llo_original>
// kernel: forward.1
$region0: #{forward.1}
  #allocation0 [shape = 'u32[]', space=smem, size = 0x4, offset = 0x4, fixed_abs, tag = 'smem constant byte address 0x4 - core index']
  #allocation1 [shape = 'u32[144,128]{1,0:T(1,128)}', space=vmem, size = 0x12000, scoped, tag = 'internal scratch']
  #allocation2 [shape = 'f32[32,152]{1,0:T(8,128)}', space=vmem, size = 0x8000, scoped, tag = 'scratch operand']
  %s0 = inlined_call_operand.vmem [shape: f32[4,152], index: 0, kind: input, shape index: {}]
  %s1 = inlined_call_operand.vmem [shape: f32[1,144], index: 1, kind: input, shape index: {}]
  %s2 = inlined_call_operand.vmem [shape: f32[32,12], index: 2, kind: input, shape index: {}]
  %s3 = inlined_call_operand.vmem [shape: f32[32,1], index: 3, kind: input, shape index: {}]
  %s4 = inlined_call_operand.vmem [shape: f32[32,96], index: 4, kind: input, shape index: {}]
  %s5 = inlined_call_operand.vmem [shape: f32[32,1], index: 5, kind: input, shape index: {}]
  %s6 = inlined_call_operand.vmem [shape: f32[32,96], index: 6, kind: input, shape index: {}]
  %s7 = inlined_call_operand.vmem [shape: f32[32,1], index: 7, kind: input, shape index: {}]
  %s8 = inlined_call_operand.vmem [shape: f32[4,352], index: 8, kind: input, shape index: {}]
  %s9 = inlined_call_operand.vmem [shape: f32[4,1], index: 9, kind: input, shape index: {}]
  %s10 = inlined_call_operand.vmem [shape: f32[4,32], index: 10, kind: input, shape index: {}]
  %s11 = inlined_call_operand.vmem [shape: f32[4,1], index: 11, kind: input, shape index: {}]
  %s12 = inlined_call_operand.vmem [shape: f32[8,128], index: 12, kind: output, shape index: {}]
  %s13 = sld [smem:[#allocation0]]
  $region58: #{forward.1} parent=0
    _
  %s15 = ssub.s32 1, %s13
  %s16 = scalar_select 0, %s15, %s13
  // Predicated region
  $region2: #{forward.1} parent=0 // pred_check
    _
  $region3: #{forward.1} parent=0 // pred_check_branch
    %18 = sbr.rel (0) target = $region5
  $region4: #{forward.1} parent=0 // pred_region
    _
  $region5: #{forward.1} parent=0 // pred_fallthru
    _
  // Predicated region
  $region6: #{forward.1} parent=0 // pred_check
    _
  $region7: #{forward.1} parent=0 // pred_check_branch
    %20 = sbr.rel (0) target = $region9
  $region8: #{forward.1} parent=0 // pred_region
    _
  $region9: #{forward.1} parent=0 // pred_fallthru
    _
  // Predicated region
  $region10: #{forward.1} parent=0 // pred_check
    _
  $region11: #{forward.1} parent=0 // pred_check_branch
    %22 = sbr.rel (0) target = $region13
  $region12: #{forward.1} parent=0 // pred_region
    _
  $region13: #{forward.1} parent=0 // pred_fallthru
    _
  // Predicated region
  $region14: #{forward.1} parent=0 // pred_check
    _
  $region15: #{forward.1} parent=0 // pred_check_branch
    %24 = sbr.rel (0) target = $region17
  $region16: #{forward.1} parent=0 // pred_region
    _
  $region17: #{forward.1} parent=0 // pred_fallthru
    _
  // Predicated region
  $region18: #{forward.1} parent=0 // pred_check
    _
  $region19: #{forward.1} parent=0 // pred_check_branch
    %26 = sbr.rel (0) target = $region21
  $region20: #{forward.1} parent=0 // pred_region
    _
  $region21: #{forward.1} parent=0 // pred_fallthru
    _
  // Predicated region
  $region22: #{forward.1} parent=0 // pred_check
    _
  $region23: #{forward.1} parent=0 // pred_check_branch
    %28 = sbr.rel (0) target = $region25
  $region24: #{forward.1} parent=0 // pred_region
    _
  $region25: #{forward.1} parent=0 // pred_fallthru
    _
  // Predicated region
  $region26: #{forward.1} parent=0 // pred_check
    _
  $region27: #{forward.1} parent=0 // pred_check_branch
    %30 = sbr.rel (0) target = $region29
  $region28: #{forward.1} parent=0 // pred_region
    _
  $region29: #{forward.1} parent=0 // pred_fallthru
    _
  // Predicated region
  $region30: #{forward.1} parent=0 // pred_check
    _
  $region31: #{forward.1} parent=0 // pred_check_branch
    %32 = sbr.rel (0) target = $region33
  $region32: #{forward.1} parent=0 // pred_region
    _
  $region33: #{forward.1} parent=0 // pred_fallthru
    _
  // Predicated region
  $region34: #{forward.1} parent=0 // pred_check
    _
  $region35: #{forward.1} parent=0 // pred_check_branch
    %34 = sbr.rel (0) target = $region37
  $region36: #{forward.1} parent=0 // pred_region
    _
  $region37: #{forward.1} parent=0 // pred_fallthru
    _
  // Predicated region
  $region38: #{forward.1} parent=0 // pred_check
    _
  $region39: #{forward.1} parent=0 // pred_check_branch
    %36 = sbr.rel (0) target = $region41
  $region40: #{forward.1} parent=0 // pred_region
    _
  $region41: #{forward.1} parent=0 // pred_fallthru
    _
  // Predicated region
  $region42: #{forward.1} parent=0 // pred_check
    _
  $region43: #{forward.1} parent=0 // pred_check_branch
    %38 = sbr.rel (0) target = $region45
  $region44: #{forward.1} parent=0 // pred_region
    _
  $region45: #{forward.1} parent=0 // pred_fallthru
    _
  // Predicated region
  $region46: #{forward.1} parent=0 // pred_check
    _
  $region47: #{forward.1} parent=0 // pred_check_branch
    %40 = sbr.rel (0) target = $region49
  $region48: #{forward.1} parent=0 // pred_region
    _
  $region49: #{forward.1} parent=0 // pred_fallthru
    _
  %41 = vst [vmem:[#allocation2] sm:$0xff] 0.0
  %vm42 = vcmask 195584
  %43 = vst.msk [vmem:[#allocation2 + $0x8] sm:$0xff] %vm42, 0.0
  %44 = vst [vmem:[#allocation2 + $0x10] sm:$0xff] 0.0
  %45 = vst.msk [vmem:[#allocation2 + $0x18] sm:$0xff] %vm42, 0.0
  %46 = vst [vmem:[#allocation2 + $0x20] sm:$0xff] 0.0
  %47 = vst.msk [vmem:[#allocation2 + $0x28] sm:$0xff] %vm42, 0.0
  %48 = vst [vmem:[#allocation2 + $0x30] sm:$0xff] 0.0
  %49 = vst.msk [vmem:[#allocation2 + $0x38] sm:$0xff] %vm42, 0.0
  %v50 = vld [vmem:[%s1] sm:$0x3]
  %v51 = vld [vmem:[%s0] sm:$0xff]
  %v53 = vcombine.high %v51, %v51
  %v55 = vcombine.low %v51, %v51
  %56 = vrot.lane.b32.xlu0 %v55, 127
  %v57 = vpop.permute.xlu0 %56
  %58 = vrot.lane.b32.xlu0 %v51, 127
  %v59 = vpop.permute.xlu0 %58
  %vm60 = vcmask 1039360
  %v61 = vsel %vm60, %v57, %v59
  %64 = vrot.lane.b32.xlu0 %v51, 126
  %v65 = vpop.permute.xlu0 %64
  %66 = vrot.lane.b32.xlu0 %v53, 126
  %v67 = vpop.permute.xlu0 %66
  %vm68 = vcmask 1031168
  %v69 = vsel %vm68, %v65, %v67
  %vm70 = vcmask 1043456
  %v71 = vsel %vm70, %v51, %v61
  %v72 = vsel %vm70, %v53, %v59
  %v73 = vld [vmem:[%s2] sm:$0xff]
  %v74 = vld [vmem:[%s2 + $0x8] sm:$0xff]
  %v75 = vld [vmem:[%s2 + $0x10] sm:$0xff]
  %v76 = vld [vmem:[%s2 + $0x18] sm:$0xff]
  %v77 = vld [vmem:[%s3] sm:$0xff]
  %v78 = vld [vmem:[%s3 + $0x8] sm:$0xff]
  %v79 = vld [vmem:[%s3 + $0x10] sm:$0xff]
  %v80 = vld [vmem:[%s3 + $0x18] sm:$0xff]
  %82 = vset.pattern.permute.xlu0 0
  %83 = vperm.xlu0 %82, %v77
  %v84 = vpop.permute.xlu0 %83
  %87 = vset.pattern.permute.xlu0 0
  %88 = vperm.xlu0 %87, %v78
  %v89 = vpop.permute.xlu0 %88
  %92 = vset.pattern.permute.xlu0 0
  %93 = vperm.xlu0 %92, %v79
  %v94 = vpop.permute.xlu0 %93
  %97 = vset.pattern.permute.xlu0 0
  %98 = vperm.xlu0 %97, %v80
  %v99 = vpop.permute.xlu0 %98
  %103 = vrot.lane.b32.xlu0 %v71, 125
  %v104 = vpop.permute.xlu0 %103
  %105 = vrot.lane.b32.xlu0 %v72, 125
  %v106 = vpop.permute.xlu0 %105
  %107 = vrot.lane.b32.xlu0 %v69, 125
  %v108 = vpop.permute.xlu0 %107
  %109 = vrot.lane.b32.xlu0 %v67, 125
  %v110 = vpop.permute.xlu0 %109
  %vm111 = vcmask 1022976
  %v112 = vsel %vm111, %v104, %v106
  %v113 = vsel %vm111, %v108, %v110
  %vm116 = vcmask 97280
  %v118 = vsel %vm116, %v73, 0
  %v121 = vsel %vm116, %v74, 0
  %v124 = vsel %vm116, %v75, 0
  %v127 = vsel %vm116, %v76, 0
  %v129 = vsel %vm70, %v113, 0
  %v131 = vsel %vm70, %v110, 0
  %133 = vmatprep.subr.mxu0 %v106
  %134 = vmatpush1.msra.mxu0 %v112
  %135 = vmatprep.subr.mxu0 %v131
  %136 = vmatpush1.msra.mxu0 %v129
  %137 = vmatprep.subr.mxu0 0.0
  %138 = vmatpush1.msra.mxu0 0.0
  %139 = vmatprep.subr.mxu0 0.0
  %140 = vmatpush1.msra.mxu0 0.0
  %141 = vmatprep.subr.mxu0 0.0
  %142 = vmatpush1.msra.mxu0 0.0
  %143 = vmatprep.subr.mxu0 0.0
  %144 = vmatpush1.msra.mxu0 0.0
  %145 = vmatprep.subr.mxu0 0.0
  %146 = vmatpush1.msra.mxu0 0.0
  %147 = vmatprep.subr.mxu0 0.0
  %148 = vmatpush1.msra.mxu0 0.0
  %149 = vmatprep.subr.mxu0 0.0
  %150 = vmatpush1.msra.mxu0 0.0
  %151 = vmatprep.subr.mxu0 0.0
  %152 = vmatpush1.msra.mxu0 0.0
  %153 = vmatprep.subr.mxu0 0.0
  %154 = vmatpush1.msra.mxu0 0.0
  %155 = vmatprep.subr.mxu0 0.0
  %156 = vmatpush1.msra.mxu0 0.0
  %157 = vmatprep.subr.mxu0 0.0
  %158 = vmatpush1.msra.mxu0 0.0
  %159 = vmatprep.subr.mxu0 0.0
  %160 = vmatpush1.msra.mxu0 0.0
  %161 = vmatprep.subr.mxu0 0.0
  %162 = vmatpush1.msra.mxu0 0.0
  %163 = vmatprep.subr.mxu0 0.0
  %164 = vmatpush1.msra.mxu0 0.0
  %165 = vmatprep.subr.mxu0 0.0
  %166 = vmatpush1.msra.mxu0 0.0
  %167 = vmatprep.subr.mxu0 0.0
  %168 = vmatpush1.msra.mxu0 0.0
  %169 = vmatprep.subr.mxu0 0.0
  %170 = vmatpush1.msra.mxu0 0.0
  %171 = vmatprep.subr.mxu0 0.0
  %172 = vmatpush1.msra.mxu0 0.0
  %173 = vmatprep.subr.mxu0 0.0
  %174 = vmatpush1.msra.mxu0 0.0
  %175 = vmatprep.subr.mxu0 0.0
  %176 = vmatpush1.msra.mxu0 0.0
  %177 = vmatprep.subr.mxu0 0.0
  %178 = vmatpush1.msra.mxu0 0.0
  %179 = vmatprep.subr.mxu0 0.0
  %180 = vmatpush1.msra.mxu0 0.0
  %181 = vmatprep.subr.mxu0 0.0
  %182 = vmatpush1.msra.mxu0 0.0
  %183 = vmatprep.subr.mxu0 0.0
  %184 = vmatpush1.msra.mxu0 0.0
  %185 = vmatprep.subr.mxu0 0.0
  %186 = vmatpush1.msra.mxu0 0.0
  %187 = vmatprep.subr.mxu0 0.0
  %188 = vmatpush1.msra.mxu0 0.0
  %189 = vmatprep.subr.mxu0 0.0
  %190 = vmatpush1.msra.mxu0 0.0
  %191 = vmatprep.subr.mxu0 0.0
  %192 = vmatpush1.msra.mxu0 0.0
  %193 = vmatprep.subr.mxu0 0.0
  %194 = vmatpush1.msra.mxu0 0.0
  %195 = vmatprep.subr.mxu0 0.0
  %196 = vmatpush1.msra.mxu0 0.0
  %197 = vmatprep.mubr.f32.mxu0 0.0
  %198 = vmatmul.mubr.f32.gmra.mrb[0].mxu0 %v118
  %v199 = vpop.f32.mrb[0].mxu0
  %v200 = vadd.f32 %v84, %v199
  %v201 = vpop.f32.mrb[0].mxu0
  %v202 = vadd.f32 %v84, %v201
  %203 = vmatprep.mubr.f32.mxu0 0.0
  %204 = vmatmul.mubr.f32.gmra.mrb[0].mxu0 %v121
  %v205 = vpop.f32.mrb[0].mxu0
  %v206 = vadd.f32 %v89, %v205
  %v207 = vpop.f32.mrb[0].mxu0
  %v208 = vadd.f32 %v89, %v207
  %209 = vmatprep.mubr.f32.mxu0 0.0
  %210 = vmatmul.mubr.f32.gmra.mrb[0].mxu0 %v124
  %v211 = vpop.f32.mrb[0].mxu0
  %v212 = vadd.f32 %v94, %v211
  %v213 = vpop.f32.mrb[0].mxu0
  %v214 = vadd.f32 %v94, %v213
  %215 = vmatprep.mubr.f32.mxu0 0.0
  %216 = vmatmul.mubr.f32.gmra.mrb[0].mxu0 %v127
  %v217 = vpop.f32.mrb[0].mxu0
  %v218 = vadd.f32 %v99, %v217
  %v219 = vpop.f32.mrb[0].mxu0
  %v220 = vadd.f32 %v99, %v219
  %221 = vdwg.mxu0
  %v222 = vmax.f32 %v200, 0.0
  %v223 = vmax.f32 %v202, 0.0
  %v224 = vmax.f32 %v206, 0.0
  %v225 = vmax.f32 %v208, 0.0
  %v226 = vmax.f32 %v212, 0.0
  %v227 = vmax.f32 %v214, 0.0
  %v228 = vmax.f32 %v218, 0.0
  %v229 = vmax.f32 %v220, 0.0
  %v231 = vlaneseq
  %v232 = vshrl.u32 %v231, 7
  %v233 = vsub.s32 0, %v232
  %v234 = vrot.slane %v50, %v233
  %v235 = vlaneseq
  %v236 = vshrl.u32 %v235, 7
  %v237 = vsub.s32 1, %v236
  %v238 = vrot.slane %v50, %v237
  %v241 = vmul.f32 %v222, %v234
  %v242 = vmul.f32 %v223, %v238
  %v243 = vmul.f32 %v224, %v234
  %v244 = vmul.f32 %v225, %v238
  %v245 = vmul.f32 %v226, %v234
  %v246 = vmul.f32 %v227, %v238
  %v247 = vmul.f32 %v228, %v234
  %v248 = vmul.f32 %v229, %v238
  %257 = vrot.lane.b32.xlu0 %v241, 4
  %v258 = vpop.permute.xlu0 %257
  %259 = vrot.lane.b32.xlu0 %v242, 4
  %v260 = vpop.permute.xlu0 %259
  %261 = vrot.lane.b32.xlu0 %v243, 4
  %v262 = vpop.permute.xlu0 %261
  %263 = vrot.lane.b32.xlu0 %v244, 4
  %v264 = vpop.permute.xlu0 %263
  %265 = vrot.lane.b32.xlu0 %v245, 4
  %v266 = vpop.permute.xlu0 %265
  %267 = vrot.lane.b32.xlu0 %v246, 4
  %v268 = vpop.permute.xlu0 %267
  %269 = vrot.lane.b32.xlu0 %v247, 4
  %v270 = vpop.permute.xlu0 %269
  %271 = vrot.lane.b32.xlu0 %v248, 4
  %v272 = vpop.permute.xlu0 %271
  %vm273 = vcmask 31744
  %v274 = vsel %vm273, %v258, %v260
  %v275 = vsel %vm273, %v262, %v264
  %v276 = vsel %vm273, %v266, %v268
  %v277 = vsel %vm273, %v270, %v272
  %vm286 = vcmask 1047584
  %287 = vst.msk [vmem:[#allocation2] sm:$0xff] %vm286, %v258
  %vm288 = vcmask 162816
  %289 = vst.msk [vmem:[#allocation2 + $0x8] sm:$0xff] %vm288, %v274
  %290 = vst.msk [vmem:[#allocation2 + $0x10] sm:$0xff] %vm286, %v262
  %291 = vst.msk [vmem:[#allocation2 + $0x18] sm:$0xff] %vm288, %v275
  %292 = vst.msk [vmem:[#allocation2 + $0x20] sm:$0xff] %vm286, %v266
  %293 = vst.msk [vmem:[#allocation2 + $0x28] sm:$0xff] %vm288, %v276
  %294 = vst.msk [vmem:[#allocation2 + $0x30] sm:$0xff] %vm286, %v270
  %295 = vst.msk [vmem:[#allocation2 + $0x38] sm:$0xff] %vm288, %v277
  %v296 = vld [vmem:[#allocation2] sm:$0xff]
  %v297 = vld [vmem:[#allocation2 + $0x8] sm:$0xff]
  %v298 = vld [vmem:[#allocation2 + $0x10] sm:$0xff]
  %v299 = vld [vmem:[#allocation2 + $0x18] sm:$0xff]
  %v300 = vld [vmem:[#allocation2 + $0x20] sm:$0xff]
  %v301 = vld [vmem:[#allocation2 + $0x28] sm:$0xff]
  %v302 = vld [vmem:[#allocation2 + $0x30] sm:$0xff]
  %v303 = vld [vmem:[#allocation2 + $0x38] sm:$0xff]
  %312 = vrot.lane.b32.xlu0 %v296, 126
  %v313 = vpop.permute.xlu0 %312
  %314 = vrot.lane.b32.xlu0 %v297, 126
  %v315 = vpop.permute.xlu0 %314
  %316 = vrot.lane.b32.xlu0 %v298, 126
  %v317 = vpop.permute.xlu0 %316
  %318 = vrot.lane.b32.xlu0 %v299, 126
  %v319 = vpop.permute.xlu0 %318
  %320 = vrot.lane.b32.xlu0 %v300, 126
  %v321 = vpop.permute.xlu0 %320
  %322 = vrot.lane.b32.xlu0 %v301, 126
  %v323 = vpop.permute.xlu0 %322
  %324 = vrot.lane.b32.xlu0 %v302, 126
  %v325 = vpop.permute.xlu0 %324
  %326 = vrot.lane.b32.xlu0 %v303, 126
  %v327 = vpop.permute.xlu0 %326
  %v328 = vsel %vm68, %v313, %v315
  %v329 = vsel %vm68, %v317, %v319
  %v330 = vsel %vm68, %v321, %v323
  %v331 = vsel %vm68, %v325, %v327
  %332 = vrot.lane.b32.xlu0 %v296, 124
  %v333 = vpop.permute.xlu0 %332
  %334 = vrot.lane.b32.xlu0 %v297, 124
  %v335 = vpop.permute.xlu0 %334
  %336 = vrot.lane.b32.xlu0 %v298, 124
  %v337 = vpop.permute.xlu0 %336
  %338 = vrot.lane.b32.xlu0 %v299, 124
  %v339 = vpop.permute.xlu0 %338
  %340 = vrot.lane.b32.xlu0 %v300, 124
  %v341 = vpop.permute.xlu0 %340
  %342 = vrot.lane.b32.xlu0 %v301, 124
  %v343 = vpop.permute.xlu0 %342
  %344 = vrot.lane.b32.xlu0 %v302, 124
  %v345 = vpop.permute.xlu0 %344
  %346 = vrot.lane.b32.xlu0 %v303, 124
  %v347 = vpop.permute.xlu0 %346
  %vm348 = vcmask 1014784
  %v349 = vsel %vm348, %v333, %v335
  %v350 = vsel %vm348, %v337, %v339
  %v351 = vsel %vm348, %v341, %v343
  %v352 = vsel %vm348, %v345, %v347
  %v353 = vld [vmem:[%s4] sm:$0xff]
  %v354 = vld [vmem:[%s4 + $0x8] sm:$0xff]
  %v355 = vld [vmem:[%s4 + $0x10] sm:$0xff]
  %v356 = vld [vmem:[%s4 + $0x18] sm:$0xff]
  %v357 = vld [vmem:[%s5] sm:$0xff]
  %v358 = vld [vmem:[%s5 + $0x8] sm:$0xff]
  %v359 = vld [vmem:[%s5 + $0x10] sm:$0xff]
  %v360 = vld [vmem:[%s5 + $0x18] sm:$0xff]
  %362 = vset.pattern.permute.xlu0 0
  %363 = vperm.xlu0 %362, %v357
  %v364 = vpop.permute.xlu0 %363
  %367 = vset.pattern.permute.xlu0 0
  %368 = vperm.xlu0 %367, %v358
  %v369 = vpop.permute.xlu0 %368
  %372 = vset.pattern.permute.xlu0 0
  %373 = vperm.xlu0 %372, %v359
  %v374 = vpop.permute.xlu0 %373
  %377 = vset.pattern.permute.xlu0 0
  %378 = vperm.xlu0 %377, %v360
  %v379 = vpop.permute.xlu0 %378
  %381 = vrot.lane.b32.xlu0 %v328, 126
  %v382 = vpop.permute.xlu0 %381
  %383 = vrot.lane.b32.xlu0 %v315, 126
  %v384 = vpop.permute.xlu0 %383
  %385 = vrot.lane.b32.xlu0 %v329, 126
  %v386 = vpop.permute.xlu0 %385
  %387 = vrot.lane.b32.xlu0 %v319, 126
  %v388 = vpop.permute.xlu0 %387
  %389 = vrot.lane.b32.xlu0 %v330, 126
  %v390 = vpop.permute.xlu0 %389
  %391 = vrot.lane.b32.xlu0 %v323, 126
  %v392 = vpop.permute.xlu0 %391
  %393 = vrot.lane.b32.xlu0 %v331, 126
  %v394 = vpop.permute.xlu0 %393
  %395 = vrot.lane.b32.xlu0 %v327, 126
  %v396 = vpop.permute.xlu0 %395
  %397 = vrot.lane.b32.xlu0 %v349, 126
  %v398 = vpop.permute.xlu0 %397
  %399 = vrot.lane.b32.xlu0 %v335, 126
  %v400 = vpop.permute.xlu0 %399
  %401 = vrot.lane.b32.xlu0 %v350, 126
  %v402 = vpop.permute.xlu0 %401
  %403 = vrot.lane.b32.xlu0 %v339, 126
  %v404 = vpop.permute.xlu0 %403
  %405 = vrot.lane.b32.xlu0 %v351, 126
  %v406 = vpop.permute.xlu0 %405
  %407 = vrot.lane.b32.xlu0 %v343, 126
  %v408 = vpop.permute.xlu0 %407
  %409 = vrot.lane.b32.xlu0 %v352, 126
  %v410 = vpop.permute.xlu0 %409
  %411 = vrot.lane.b32.xlu0 %v347, 126
  %v412 = vpop.permute.xlu0 %411
  %v413 = vsel %vm68, %v382, %v384
  %v414 = vsel %vm68, %v386, %v388
  %v415 = vsel %vm68, %v390, %v392
  %v416 = vsel %vm68, %v394, %v396
  %v417 = vsel %vm68, %v398, %v400
  %v418 = vsel %vm68, %v402, %v404
  %v419 = vsel %vm68, %v406, %v408
  %v420 = vsel %vm68, %v410, %v412
  %vm445 = vcmask 785408
  %v447 = vsel %vm445, %v353, 0
  %v450 = vsel %vm445, %v354, 0
  %v453 = vsel %vm445, %v355, 0
  %v456 = vsel %vm445, %v356, 0
  %458 = vmatprep.subr.mxu0 %v315
  %459 = vmatpush1.msra.mxu0 %v328
  %460 = vmatprep.subr.mxu0 %v319
  %461 = vmatpush1.msra.mxu0 %v329
  %462 = vmatprep.subr.mxu0 %v323
  %463 = vmatpush1.msra.mxu0 %v330
  %464 = vmatprep.subr.mxu0 %v327
  %465 = vmatpush1.msra.mxu0 %v331
  %466 = vmatprep.subr.mxu0 %v384
  %467 = vmatpush1.msra.mxu0 %v413
  %468 = vmatprep.subr.mxu0 %v388
  %469 = vmatpush1.msra.mxu0 %v414
  %470 = vmatprep.subr.mxu0 %v392
  %471 = vmatpush1.msra.mxu0 %v415
  %472 = vmatprep.subr.mxu0 %v396
  %473 = vmatpush1.msra.mxu0 %v416
  %474 = vmatprep.subr.mxu0 %v400
  %475 = vmatpush1.msra.mxu0 %v417
  %476 = vmatprep.subr.mxu0 %v404
  %477 = vmatpush1.msra.mxu0 %v418
  %478 = vmatprep.subr.mxu0 %v408
  %479 = vmatpush1.msra.mxu0 %v419
  %480 = vmatprep.subr.mxu0 %v412
  %481 = vmatpush1.msra.mxu0 %v420
  %482 = vmatprep.subr.mxu0 0.0
  %483 = vmatpush1.msra.mxu0 0.0
  %484 = vmatprep.subr.mxu0 0.0
  %485 = vmatpush1.msra.mxu0 0.0
  %486 = vmatprep.subr.mxu0 0.0
  %487 = vmatpush1.msra.mxu0 0.0
  %488 = vmatprep.subr.mxu0 0.0
  %489 = vmatpush1.msra.mxu0 0.0
  %490 = vmatprep.subr.mxu0 0.0
  %491 = vmatpush1.msra.mxu0 0.0
  %492 = vmatprep.subr.mxu0 0.0
  %493 = vmatpush1.msra.mxu0 0.0
  %494 = vmatprep.subr.mxu0 0.0
  %495 = vmatpush1.msra.mxu0 0.0
  %496 = vmatprep.subr.mxu0 0.0
  %497 = vmatpush1.msra.mxu0 0.0
  %498 = vmatprep.subr.mxu0 0.0
  %499 = vmatpush1.msra.mxu0 0.0
  %500 = vmatprep.subr.mxu0 0.0
  %501 = vmatpush1.msra.mxu0 0.0
  %502 = vmatprep.subr.mxu0 0.0
  %503 = vmatpush1.msra.mxu0 0.0
  %504 = vmatprep.subr.mxu0 0.0
  %505 = vmatpush1.msra.mxu0 0.0
  %506 = vmatprep.subr.mxu0 0.0
  %507 = vmatpush1.msra.mxu0 0.0
  %508 = vmatprep.subr.mxu0 0.0
  %509 = vmatpush1.msra.mxu0 0.0
  %510 = vmatprep.subr.mxu0 0.0
  %511 = vmatpush1.msra.mxu0 0.0
  %512 = vmatprep.subr.mxu0 0.0
  %513 = vmatpush1.msra.mxu0 0.0
  %514 = vmatprep.subr.mxu0 0.0
  %515 = vmatpush1.msra.mxu0 0.0
  %516 = vmatprep.subr.mxu0 0.0
  %517 = vmatpush1.msra.mxu0 0.0
  %518 = vmatprep.subr.mxu0 0.0
  %519 = vmatpush1.msra.mxu0 0.0
  %520 = vmatprep.subr.mxu0 0.0
  %521 = vmatpush1.msra.mxu0 0.0
  %522 = vmatprep.mubr.f32.mxu0 0.0
  %523 = vmatmul.mubr.f32.gmra.mrb[0].mxu0 %v447
  %v524 = vpop.f32.mrb[0].mxu0
  %v525 = vadd.f32 %v364, %v524
  %v526 = vpop.f32.mrb[0].mxu0
  %v527 = vadd.f32 %v364, %v526
  %528 = vmatprep.mubr.f32.mxu0 0.0
  %529 = vmatmul.mubr.f32.gmra.mrb[0].mxu0 %v450
  %v530 = vpop.f32.mrb[0].mxu0
  %v531 = vadd.f32 %v369, %v530
  %v532 = vpop.f32.mrb[0].mxu0
  %v533 = vadd.f32 %v369, %v532
  %534 = vmatprep.mubr.f32.mxu0 0.0
  %535 = vmatmul.mubr.f32.gmra.mrb[0].mxu0 %v453
  %v536 = vpop.f32.mrb[0].mxu0
  %v537 = vadd.f32 %v374, %v536
  %v538 = vpop.f32.mrb[0].mxu0
  %v539 = vadd.f32 %v374, %v538
  %540 = vmatprep.mubr.f32.mxu0 0.0
  %541 = vmatmul.mubr.f32.gmra.mrb[0].mxu0 %v456
  %v542 = vpop.f32.mrb[0].mxu0
  %v543 = vadd.f32 %v379, %v542
  %v544 = vpop.f32.mrb[0].mxu0
  %v545 = vadd.f32 %v379, %v544
  %546 = vdwg.mxu0
  %v547 = vmax.f32 %v525, 0.0
  %v548 = vmax.f32 %v527, 0.0
  %v549 = vmax.f32 %v531, 0.0
  %v550 = vmax.f32 %v533, 0.0
  %v551 = vmax.f32 %v537, 0.0
  %v552 = vmax.f32 %v539, 0.0
  %v553 = vmax.f32 %v543, 0.0
  %v554 = vmax.f32 %v545, 0.0
  %v555 = vmul.f32 %v547, %v234
  %v556 = vmul.f32 %v548, %v238
  %v557 = vmul.f32 %v549, %v234
  %v558 = vmul.f32 %v550, %v238
  %v559 = vmul.f32 %v551, %v234
  %v560 = vmul.f32 %v552, %v238
  %v561 = vmul.f32 %v553, %v234
  %v562 = vmul.f32 %v554, %v238
  %v563 = vadd.f32 %v241, %v555
  %v564 = vadd.f32 %v242, %v556
  %v565 = vadd.f32 %v243, %v557
  %v566 = vadd.f32 %v244, %v558
  %v567 = vadd.f32 %v245, %v559
  %v568 = vadd.f32 %v246, %v560
  %v569 = vadd.f32 %v247, %v561
  %v570 = vadd.f32 %v248, %v562
  %579 = vrot.lane.b32.xlu0 %v563, 4
  %v580 = vpop.permute.xlu0 %579
  %581 = vrot.lane.b32.xlu0 %v564, 4
  %v582 = vpop.permute.xlu0 %581
  %583 = vrot.lane.b32.xlu0 %v565, 4
  %v584 = vpop.permute.xlu0 %583
  %585 = vrot.lane.b32.xlu0 %v566, 4
  %v586 = vpop.permute.xlu0 %585
  %587 = vrot.lane.b32.xlu0 %v567, 4
  %v588 = vpop.permute.xlu0 %587
  %589 = vrot.lane.b32.xlu0 %v568, 4
  %v590 = vpop.permute.xlu0 %589
  %591 = vrot.lane.b32.xlu0 %v569, 4
  %v592 = vpop.permute.xlu0 %591
  %593 = vrot.lane.b32.xlu0 %v570, 4
  %v594 = vpop.permute.xlu0 %593
  %v595 = vsel %vm273, %v580, %v582
  %v596 = vsel %vm273, %v584, %v586
  %v597 = vsel %vm273, %v588, %v590
  %v598 = vsel %vm273, %v592, %v594
  %607 = vst.msk [vmem:[#allocation2] sm:$0xff] %vm286, %v580
  %608 = vst.msk [vmem:[#allocation2 + $0x8] sm:$0xff] %vm288, %v595
  %609 = vst.msk [vmem:[#allocation2 + $0x10] sm:$0xff] %vm286, %v584
  %610 = vst.msk [vmem:[#allocation2 + $0x18] sm:$0xff] %vm288, %v596
  %611 = vst.msk [vmem:[#allocation2 + $0x20] sm:$0xff] %vm286, %v588
  %612 = vst.msk [vmem:[#allocation2 + $0x28] sm:$0xff] %vm288, %v597
  %613 = vst.msk [vmem:[#allocation2 + $0x30] sm:$0xff] %vm286, %v592
  %614 = vst.msk [vmem:[#allocation2 + $0x38] sm:$0xff] %vm288, %v598
  %v615 = vld [vmem:[#allocation2] sm:$0xff]
  %v616 = vld [vmem:[#allocation2 + $0x8] sm:$0xff]
  %v617 = vld [vmem:[#allocation2 + $0x10] sm:$0xff]
  %v618 = vld [vmem:[#allocation2 + $0x18] sm:$0xff]
  %v619 = vld [vmem:[#allocation2 + $0x20] sm:$0xff]
  %v620 = vld [vmem:[#allocation2 + $0x28] sm:$0xff]
  %v621 = vld [vmem:[#allocation2 + $0x30] sm:$0xff]
  %v622 = vld [vmem:[#allocation2 + $0x38] sm:$0xff]
  %631 = vrot.lane.b32.xlu0 %v615, 124
  %v632 = vpop.permute.xlu0 %631
  %633 = vrot.lane.b32.xlu0 %v616, 124
  %v634 = vpop.permute.xlu0 %633
  %635 = vrot.lane.b32.xlu0 %v617, 124
  %v636 = vpop.permute.xlu0 %635
  %637 = vrot.lane.b32.xlu0 %v618, 124
  %v638 = vpop.permute.xlu0 %637
  %639 = vrot.lane.b32.xlu0 %v619, 124
  %v640 = vpop.permute.xlu0 %639
  %641 = vrot.lane.b32.xlu0 %v620, 124
  %v642 = vpop.permute.xlu0 %641
  %643 = vrot.lane.b32.xlu0 %v621, 124
  %v644 = vpop.permute.xlu0 %643
  %645 = vrot.lane.b32.xlu0 %v622, 124
  %v646 = vpop.permute.xlu0 %645
  %v647 = vsel %vm348, %v632, %v634
  %v648 = vsel %vm348, %v636, %v638
  %v649 = vsel %vm348, %v640, %v642
  %v650 = vsel %vm348, %v644, %v646
  %659 = vrot.lane.b32.xlu0 %v615, 120
  %v660 = vpop.permute.xlu0 %659
  %661 = vrot.lane.b32.xlu0 %v616, 120
  %v662 = vpop.permute.xlu0 %661
  %663 = vrot.lane.b32.xlu0 %v617, 120
  %v664 = vpop.permute.xlu0 %663
  %665 = vrot.lane.b32.xlu0 %v618, 120
  %v666 = vpop.permute.xlu0 %665
  %667 = vrot.lane.b32.xlu0 %v619, 120
  %v668 = vpop.permute.xlu0 %667
  %669 = vrot.lane.b32.xlu0 %v620, 120
  %v670 = vpop.permute.xlu0 %669
  %671 = vrot.lane.b32.xlu0 %v621, 120
  %v672 = vpop.permute.xlu0 %671
  %673 = vrot.lane.b32.xlu0 %v622, 120
  %v674 = vpop.permute.xlu0 %673
  %vm675 = vcmask 982016
  %v676 = vsel %vm675, %v660, %v662
  %v677 = vsel %vm675, %v664, %v666
  %v678 = vsel %vm675, %v668, %v670
  %v679 = vsel %vm675, %v672, %v674
  %v688 = vld [vmem:[%s6] sm:$0xff]
  %v689 = vld [vmem:[%s6 + $0x8] sm:$0xff]
  %v690 = vld [vmem:[%s6 + $0x10] sm:$0xff]
  %v691 = vld [vmem:[%s6 + $0x18] sm:$0xff]
  %v692 = vld [vmem:[%s7] sm:$0xff]
  %v693 = vld [vmem:[%s7 + $0x8] sm:$0xff]
  %v694 = vld [vmem:[%s7 + $0x10] sm:$0xff]
  %v695 = vld [vmem:[%s7 + $0x18] sm:$0xff]
  %697 = vset.pattern.permute.xlu0 0
  %698 = vperm.xlu0 %697, %v692
  %v699 = vpop.permute.xlu0 %698
  %702 = vset.pattern.permute.xlu0 0
  %703 = vperm.xlu0 %702, %v693
  %v704 = vpop.permute.xlu0 %703
  %707 = vset.pattern.permute.xlu0 0
  %708 = vperm.xlu0 %707, %v694
  %v709 = vpop.permute.xlu0 %708
  %712 = vset.pattern.permute.xlu0 0
  %713 = vperm.xlu0 %712, %v695
  %v714 = vpop.permute.xlu0 %713
  %v717 = vsel %vm445, %v688, 0
  %v720 = vsel %vm445, %v689, 0
  %v723 = vsel %vm445, %v690, 0
  %v726 = vsel %vm445, %v691, 0
  %728 = vmatprep.subr.mxu0 %v616
  %729 = vmatpush1.msra.mxu0 %v615
  %730 = vmatprep.subr.mxu0 %v618
  %731 = vmatpush1.msra.mxu0 %v617
  %732 = vmatprep.subr.mxu0 %v620
  %733 = vmatpush1.msra.mxu0 %v619
  %734 = vmatprep.subr.mxu0 %v622
  %735 = vmatpush1.msra.mxu0 %v621
  %736 = vmatprep.subr.mxu0 %v634
  %737 = vmatpush1.msra.mxu0 %v647
  %738 = vmatprep.subr.mxu0 %v638
  %739 = vmatpush1.msra.mxu0 %v648
  %740 = vmatprep.subr.mxu0 %v642
  %741 = vmatpush1.msra.mxu0 %v649
  %742 = vmatprep.subr.mxu0 %v646
  %743 = vmatpush1.msra.mxu0 %v650
  %744 = vmatprep.subr.mxu0 %v662
  %745 = vmatpush1.msra.mxu0 %v676
  %746 = vmatprep.subr.mxu0 %v666
  %747 = vmatpush1.msra.mxu0 %v677
  %748 = vmatprep.subr.mxu0 %v670
  %749 = vmatpush1.msra.mxu0 %v678
  %750 = vmatprep.subr.mxu0 %v674
  %751 = vmatpush1.msra.mxu0 %v679
  %752 = vmatprep.subr.mxu0 0.0
  %753 = vmatpush1.msra.mxu0 0.0
  %754 = vmatprep.subr.mxu0 0.0
  %755 = vmatpush1.msra.mxu0 0.0
  %756 = vmatprep.subr.mxu0 0.0
  %757 = vmatpush1.msra.mxu0 0.0
  %758 = vmatprep.subr.mxu0 0.0
  %759 = vmatpush1.msra.mxu0 0.0
  %760 = vmatprep.subr.mxu0 0.0
  %761 = vmatpush1.msra.mxu0 0.0
  %762 = vmatprep.subr.mxu0 0.0
  %763 = vmatpush1.msra.mxu0 0.0
  %764 = vmatprep.subr.mxu0 0.0
  %765 = vmatpush1.msra.mxu0 0.0
  %766 = vmatprep.subr.mxu0 0.0
  %767 = vmatpush1.msra.mxu0 0.0
  %768 = vmatprep.subr.mxu0 0.0
  %769 = vmatpush1.msra.mxu0 0.0
  %770 = vmatprep.subr.mxu0 0.0
  %771 = vmatpush1.msra.mxu0 0.0
  %772 = vmatprep.subr.mxu0 0.0
  %773 = vmatpush1.msra.mxu0 0.0
  %774 = vmatprep.subr.mxu0 0.0
  %775 = vmatpush1.msra.mxu0 0.0
  %776 = vmatprep.subr.mxu0 0.0
  %777 = vmatpush1.msra.mxu0 0.0
  %778 = vmatprep.subr.mxu0 0.0
  %779 = vmatpush1.msra.mxu0 0.0
  %780 = vmatprep.subr.mxu0 0.0
  %781 = vmatpush1.msra.mxu0 0.0
  %782 = vmatprep.subr.mxu0 0.0
  %783 = vmatpush1.msra.mxu0 0.0
  %784 = vmatprep.subr.mxu0 0.0
  %785 = vmatpush1.msra.mxu0 0.0
  %786 = vmatprep.subr.mxu0 0.0
  %787 = vmatpush1.msra.mxu0 0.0
  %788 = vmatprep.subr.mxu0 0.0
  %789 = vmatpush1.msra.mxu0 0.0
  %790 = vmatprep.subr.mxu0 0.0
  %791 = vmatpush1.msra.mxu0 0.0
  %792 = vmatprep.mubr.f32.mxu0 0.0
  %793 = vmatmul.mubr.f32.gmra.mrb[0].mxu0 %v717
  %v794 = vpop.f32.mrb[0].mxu0
  %v795 = vadd.f32 %v699, %v794
  %v796 = vpop.f32.mrb[0].mxu0
  %v797 = vadd.f32 %v699, %v796
  %798 = vmatprep.mubr.f32.mxu0 0.0
  %799 = vmatmul.mubr.f32.gmra.mrb[0].mxu0 %v720
  %v800 = vpop.f32.mrb[0].mxu0
  %v801 = vadd.f32 %v704, %v800
  %v802 = vpop.f32.mrb[0].mxu0
  %v803 = vadd.f32 %v704, %v802
  %804 = vmatprep.mubr.f32.mxu0 0.0
  %805 = vmatmul.mubr.f32.gmra.mrb[0].mxu0 %v723
  %v806 = vpop.f32.mrb[0].mxu0
  %v807 = vadd.f32 %v709, %v806
  %v808 = vpop.f32.mrb[0].mxu0
  %v809 = vadd.f32 %v709, %v808
  %810 = vmatprep.mubr.f32.mxu0 0.0
  %811 = vmatmul.mubr.f32.gmra.mrb[0].mxu0 %v726
  %v812 = vpop.f32.mrb[0].mxu0
  %v813 = vadd.f32 %v714, %v812
  %v814 = vpop.f32.mrb[0].mxu0
  %v815 = vadd.f32 %v714, %v814
  %816 = vdwg.mxu0
  %v817 = vmax.f32 %v795, 0.0
  %v818 = vmax.f32 %v797, 0.0
  %v819 = vmax.f32 %v801, 0.0
  %v820 = vmax.f32 %v803, 0.0
  %v821 = vmax.f32 %v807, 0.0
  %v822 = vmax.f32 %v809, 0.0
  %v823 = vmax.f32 %v813, 0.0
  %v824 = vmax.f32 %v815, 0.0
  %v825 = vadd.f32 %v563, %v817
  %v826 = vadd.f32 %v564, %v818
  %v827 = vadd.f32 %v565, %v819
  %v828 = vadd.f32 %v566, %v820
  %v829 = vadd.f32 %v567, %v821
  %v830 = vadd.f32 %v568, %v822
  %v831 = vadd.f32 %v569, %v823
  %v832 = vadd.f32 %v570, %v824
  %837 = vrot.lane.b32.xlu0 %v825, 127
  %v838 = vpop.permute.xlu0 %837
  %839 = vrot.lane.b32.xlu0 %v827, 127
  %v840 = vpop.permute.xlu0 %839
  %841 = vrot.lane.b32.xlu0 %v829, 127
  %v842 = vpop.permute.xlu0 %841
  %843 = vrot.lane.b32.xlu0 %v831, 127
  %v844 = vpop.permute.xlu0 %843
  %845 = vrot.lane.b32.xlu0 %v825, 126
  %v846 = vpop.permute.xlu0 %845
  %847 = vrot.lane.b32.xlu0 %v827, 126
  %v848 = vpop.permute.xlu0 %847
  %849 = vrot.lane.b32.xlu0 %v829, 126
  %v850 = vpop.permute.xlu0 %849
  %851 = vrot.lane.b32.xlu0 %v831, 126
  %v852 = vpop.permute.xlu0 %851
  %853 = vrot.lane.b32.xlu0 %v825, 125
  %v854 = vpop.permute.xlu0 %853
  %855 = vrot.lane.b32.xlu0 %v827, 125
  %v856 = vpop.permute.xlu0 %855
  %857 = vrot.lane.b32.xlu0 %v829, 125
  %v858 = vpop.permute.xlu0 %857
  %859 = vrot.lane.b32.xlu0 %v831, 125
  %v860 = vpop.permute.xlu0 %859
  %861 = vrot.lane.b32.xlu0 %v825, 124
  %v862 = vpop.permute.xlu0 %861
  %863 = vrot.lane.b32.xlu0 %v827, 124
  %v864 = vpop.permute.xlu0 %863
  %865 = vrot.lane.b32.xlu0 %v829, 124
  %v866 = vpop.permute.xlu0 %865
  %867 = vrot.lane.b32.xlu0 %v831, 124
  %v868 = vpop.permute.xlu0 %867
  %869 = vrot.lane.b32.xlu0 %v825, 123
  %v870 = vpop.permute.xlu0 %869
  %871 = vrot.lane.b32.xlu0 %v827, 123
  %v872 = vpop.permute.xlu0 %871
  %873 = vrot.lane.b32.xlu0 %v829, 123
  %v874 = vpop.permute.xlu0 %873
  %875 = vrot.lane.b32.xlu0 %v831, 123
  %v876 = vpop.permute.xlu0 %875
  %881 = vrot.lane.b32.xlu0 %v825, 122
  %v882 = vpop.permute.xlu0 %881
  %883 = vrot.lane.b32.xlu0 %v826, 122
  %v884 = vpop.permute.xlu0 %883
  %885 = vrot.lane.b32.xlu0 %v827, 122
  %v886 = vpop.permute.xlu0 %885
  %887 = vrot.lane.b32.xlu0 %v828, 122
  %v888 = vpop.permute.xlu0 %887
  %889 = vrot.lane.b32.xlu0 %v829, 122
  %v890 = vpop.permute.xlu0 %889
  %891 = vrot.lane.b32.xlu0 %v830, 122
  %v892 = vpop.permute.xlu0 %891
  %893 = vrot.lane.b32.xlu0 %v831, 122
  %v894 = vpop.permute.xlu0 %893
  %895 = vrot.lane.b32.xlu0 %v832, 122
  %v896 = vpop.permute.xlu0 %895
  %vm897 = vcmask 998400
  %v898 = vsel %vm897, %v882, %v884
  %v899 = vsel %vm897, %v886, %v888
  %v900 = vsel %vm897, %v890, %v892
  %v901 = vsel %vm897, %v894, %v896
  %902 = vrot.lane.b32.xlu0 %v825, 121
  %v903 = vpop.permute.xlu0 %902
  %904 = vrot.lane.b32.xlu0 %v826, 121
  %v905 = vpop.permute.xlu0 %904
  %906 = vrot.lane.b32.xlu0 %v827, 121
  %v907 = vpop.permute.xlu0 %906
  %908 = vrot.lane.b32.xlu0 %v828, 121
  %v909 = vpop.permute.xlu0 %908
  %910 = vrot.lane.b32.xlu0 %v829, 121
  %v911 = vpop.permute.xlu0 %910
  %912 = vrot.lane.b32.xlu0 %v830, 121
  %v913 = vpop.permute.xlu0 %912
  %914 = vrot.lane.b32.xlu0 %v831, 121
  %v915 = vpop.permute.xlu0 %914
  %916 = vrot.lane.b32.xlu0 %v832, 121
  %v917 = vpop.permute.xlu0 %916
  %vm918 = vcmask 990208
  %v919 = vsel %vm918, %v903, %v905
  %v920 = vsel %vm918, %v907, %v909
  %v921 = vsel %vm918, %v911, %v913
  %v922 = vsel %vm918, %v915, %v917
  %923 = vrot.lane.b32.xlu0 %v825, 120
  %v924 = vpop.permute.xlu0 %923
  %925 = vrot.lane.b32.xlu0 %v826, 120
  %v926 = vpop.permute.xlu0 %925
  %927 = vrot.lane.b32.xlu0 %v827, 120
  %v928 = vpop.permute.xlu0 %927
  %929 = vrot.lane.b32.xlu0 %v828, 120
  %v930 = vpop.permute.xlu0 %929
  %931 = vrot.lane.b32.xlu0 %v829, 120
  %v932 = vpop.permute.xlu0 %931
  %933 = vrot.lane.b32.xlu0 %v830, 120
  %v934 = vpop.permute.xlu0 %933
  %935 = vrot.lane.b32.xlu0 %v831, 120
  %v936 = vpop.permute.xlu0 %935
  %937 = vrot.lane.b32.xlu0 %v832, 120
  %v938 = vpop.permute.xlu0 %937
  %v939 = vsel %vm675, %v924, %v926
  %v940 = vsel %vm675, %v928, %v930
  %v941 = vsel %vm675, %v932, %v934
  %v942 = vsel %vm675, %v936, %v938
  %943 = vrot.lane.b32.xlu0 %v825, 119
  %v944 = vpop.permute.xlu0 %943
  %945 = vrot.lane.b32.xlu0 %v826, 119
  %v946 = vpop.permute.xlu0 %945
  %947 = vrot.lane.b32.xlu0 %v827, 119
  %v948 = vpop.permute.xlu0 %947
  %949 = vrot.lane.b32.xlu0 %v828, 119
  %v950 = vpop.permute.xlu0 %949
  %951 = vrot.lane.b32.xlu0 %v829, 119
  %v952 = vpop.permute.xlu0 %951
  %953 = vrot.lane.b32.xlu0 %v830, 119
  %v954 = vpop.permute.xlu0 %953
  %955 = vrot.lane.b32.xlu0 %v831, 119
  %v956 = vpop.permute.xlu0 %955
  %957 = vrot.lane.b32.xlu0 %v832, 119
  %v958 = vpop.permute.xlu0 %957
  %vm959 = vcmask 973824
  %v960 = vsel %vm959, %v944, %v946
  %v961 = vsel %vm959, %v948, %v950
  %v962 = vsel %vm959, %v952, %v954
  %v963 = vsel %vm959, %v956, %v958
  %964 = vrot.lane.b32.xlu0 %v825, 118
  %v965 = vpop.permute.xlu0 %964
  %966 = vrot.lane.b32.xlu0 %v826, 118
  %v967 = vpop.permute.xlu0 %966
  %968 = vrot.lane.b32.xlu0 %v827, 118
  %v969 = vpop.permute.xlu0 %968
  %970 = vrot.lane.b32.xlu0 %v828, 118
  %v971 = vpop.permute.xlu0 %970
  %972 = vrot.lane.b32.xlu0 %v829, 118
  %v973 = vpop.permute.xlu0 %972
  %974 = vrot.lane.b32.xlu0 %v830, 118
  %v975 = vpop.permute.xlu0 %974
  %976 = vrot.lane.b32.xlu0 %v831, 118
  %v977 = vpop.permute.xlu0 %976
  %978 = vrot.lane.b32.xlu0 %v832, 118
  %v979 = vpop.permute.xlu0 %978
  %vm980 = vcmask 965632
  %v981 = vsel %vm980, %v965, %v967
  %v982 = vsel %vm980, %v969, %v971
  %v983 = vsel %vm980, %v973, %v975
  %v984 = vsel %vm980, %v977, %v979
  %v985 = vld [vmem:[%s8] sm:$0xff]
  %v986 = vld [vmem:[%s8 + $0x8] sm:$0xf]
  %v987 = vld [vmem:[%s9] sm:$0xf]
  %989 = vset.pattern.permute.xlu0 0
  %990 = vperm.xlu0 %989, %v987
  %v991 = vpop.permute.xlu0 %990
  %v995 = vcombine.high %v985, %v985
  %997 = vrot.lane.b32.xlu0 %v825, 117
  %v998 = vpop.permute.xlu0 %997
  %999 = vrot.lane.b32.xlu0 %v827, 117
  %v1000 = vpop.permute.xlu0 %999
  %1001 = vrot.lane.b32.xlu0 %v829, 117
  %v1002 = vpop.permute.xlu0 %1001
  %1003 = vrot.lane.b32.xlu0 %v831, 117
  %v1004 = vpop.permute.xlu0 %1003
  %1005 = vrot.lane.b32.xlu0 %v838, 117
  %v1006 = vpop.permute.xlu0 %1005
  %1007 = vrot.lane.b32.xlu0 %v840, 117
  %v1008 = vpop.permute.xlu0 %1007
  %1009 = vrot.lane.b32.xlu0 %v842, 117
  %v1010 = vpop.permute.xlu0 %1009
  %1011 = vrot.lane.b32.xlu0 %v844, 117
  %v1012 = vpop.permute.xlu0 %1011
  %1013 = vrot.lane.b32.xlu0 %v846, 117
  %v1014 = vpop.permute.xlu0 %1013
  %1015 = vrot.lane.b32.xlu0 %v848, 117
  %v1016 = vpop.permute.xlu0 %1015
  %1017 = vrot.lane.b32.xlu0 %v850, 117
  %v1018 = vpop.permute.xlu0 %1017
  %1019 = vrot.lane.b32.xlu0 %v852, 117
  %v1020 = vpop.permute.xlu0 %1019
  %1021 = vrot.lane.b32.xlu0 %v854, 117
  %v1022 = vpop.permute.xlu0 %1021
  %1023 = vrot.lane.b32.xlu0 %v856, 117
  %v1024 = vpop.permute.xlu0 %1023
  %1025 = vrot.lane.b32.xlu0 %v858, 117
  %v1026 = vpop.permute.xlu0 %1025
  %1027 = vrot.lane.b32.xlu0 %v860, 117
  %v1028 = vpop.permute.xlu0 %1027
  %1029 = vrot.lane.b32.xlu0 %v862, 117
  %v1030 = vpop.permute.xlu0 %1029
  %1031 = vrot.lane.b32.xlu0 %v864, 117
  %v1032 = vpop.permute.xlu0 %1031
  %1033 = vrot.lane.b32.xlu0 %v866, 117
  %v1034 = vpop.permute.xlu0 %1033
  %1035 = vrot.lane.b32.xlu0 %v868, 117
  %v1036 = vpop.permute.xlu0 %1035
  %1037 = vrot.lane.b32.xlu0 %v870, 117
  %v1038 = vpop.permute.xlu0 %1037
  %1039 = vrot.lane.b32.xlu0 %v872, 117
  %v1040 = vpop.permute.xlu0 %1039
  %1041 = vrot.lane.b32.xlu0 %v874, 117
  %v1042 = vpop.permute.xlu0 %1041
  %1043 = vrot.lane.b32.xlu0 %v876, 117
  %v1044 = vpop.permute.xlu0 %1043
  %1045 = vrot.lane.b32.xlu0 %v898, 117
  %v1046 = vpop.permute.xlu0 %1045
  %1047 = vrot.lane.b32.xlu0 %v899, 117
  %v1048 = vpop.permute.xlu0 %1047
  %1049 = vrot.lane.b32.xlu0 %v900, 117
  %v1050 = vpop.permute.xlu0 %1049
  %1051 = vrot.lane.b32.xlu0 %v901, 117
  %v1052 = vpop.permute.xlu0 %1051
  %1053 = vrot.lane.b32.xlu0 %v919, 117
  %v1054 = vpop.permute.xlu0 %1053
  %1055 = vrot.lane.b32.xlu0 %v920, 117
  %v1056 = vpop.permute.xlu0 %1055
  %1057 = vrot.lane.b32.xlu0 %v921, 117
  %v1058 = vpop.permute.xlu0 %1057
  %1059 = vrot.lane.b32.xlu0 %v922, 117
  %v1060 = vpop.permute.xlu0 %1059
  %1061 = vrot.lane.b32.xlu0 %v939, 117
  %v1062 = vpop.permute.xlu0 %1061
  %1063 = vrot.lane.b32.xlu0 %v940, 117
  %v1064 = vpop.permute.xlu0 %1063
  %1065 = vrot.lane.b32.xlu0 %v941, 117
  %v1066 = vpop.permute.xlu0 %1065
  %1067 = vrot.lane.b32.xlu0 %v942, 117
  %v1068 = vpop.permute.xlu0 %1067
  %1069 = vrot.lane.b32.xlu0 %v960, 117
  %v1070 = vpop.permute.xlu0 %1069
  %1071 = vrot.lane.b32.xlu0 %v961, 117
  %v1072 = vpop.permute.xlu0 %1071
  %1073 = vrot.lane.b32.xlu0 %v962, 117
  %v1074 = vpop.permute.xlu0 %1073
  %1075 = vrot.lane.b32.xlu0 %v963, 117
  %v1076 = vpop.permute.xlu0 %1075
  %1077 = vrot.lane.b32.xlu0 %v981, 117
  %v1078 = vpop.permute.xlu0 %1077
  %1079 = vrot.lane.b32.xlu0 %v982, 117
  %v1080 = vpop.permute.xlu0 %1079
  %1081 = vrot.lane.b32.xlu0 %v983, 117
  %v1082 = vpop.permute.xlu0 %1081
  %1083 = vrot.lane.b32.xlu0 %v984, 117
  %v1084 = vpop.permute.xlu0 %1083
  %v1129 = vsel %vm445, %v986, 0
  %1131 = vmatprep.subr.mxu0 0.0
  %1132 = vmatpush1.msra.mxu0 %v998
  %1133 = vmatprep.subr.mxu0 0.0
  %1134 = vmatpush1.msra.mxu0 %v1000
  %1135 = vmatprep.subr.mxu0 0.0
  %1136 = vmatpush1.msra.mxu0 %v1002
  %1137 = vmatprep.subr.mxu0 0.0
  %1138 = vmatpush1.msra.mxu0 %v1004
  %1139 = vmatprep.subr.mxu0 0.0
  %1140 = vmatpush1.msra.mxu0 %v1006
  %1141 = vmatprep.subr.mxu0 0.0
  %1142 = vmatpush1.msra.mxu0 %v1008
  %1143 = vmatprep.subr.mxu0 0.0
  %1144 = vmatpush1.msra.mxu0 %v1010
  %1145 = vmatprep.subr.mxu0 0.0
  %1146 = vmatpush1.msra.mxu0 %v1012
  %1147 = vmatprep.subr.mxu0 0.0
  %1148 = vmatpush1.msra.mxu0 %v1014
  %1149 = vmatprep.subr.mxu0 0.0
  %1150 = vmatpush1.msra.mxu0 %v1016
  %1151 = vmatprep.subr.mxu0 0.0
  %1152 = vmatpush1.msra.mxu0 %v1018
  %1153 = vmatprep.subr.mxu0 0.0
  %1154 = vmatpush1.msra.mxu0 %v1020
  %1155 = vmatprep.subr.mxu0 0.0
  %1156 = vmatpush1.msra.mxu0 %v1022
  %1157 = vmatprep.subr.mxu0 0.0
  %1158 = vmatpush1.msra.mxu0 %v1024
  %1159 = vmatprep.subr.mxu0 0.0
  %1160 = vmatpush1.msra.mxu0 %v1026
  %1161 = vmatprep.subr.mxu0 0.0
  %1162 = vmatpush1.msra.mxu0 %v1028
  %1163 = vmatprep.subr.mxu0 0.0
  %1164 = vmatpush1.msra.mxu0 %v1030
  %1165 = vmatprep.subr.mxu0 0.0
  %1166 = vmatpush1.msra.mxu0 %v1032
  %1167 = vmatprep.subr.mxu0 0.0
  %1168 = vmatpush1.msra.mxu0 %v1034
  %1169 = vmatprep.subr.mxu0 0.0
  %1170 = vmatpush1.msra.mxu0 %v1036
  %1171 = vmatprep.subr.mxu0 0.0
  %1172 = vmatpush1.msra.mxu0 %v1038
  %1173 = vmatprep.subr.mxu0 0.0
  %1174 = vmatpush1.msra.mxu0 %v1040
  %1175 = vmatprep.subr.mxu0 0.0
  %1176 = vmatpush1.msra.mxu0 %v1042
  %1177 = vmatprep.subr.mxu0 0.0
  %1178 = vmatpush1.msra.mxu0 %v1044
  %1179 = vmatprep.subr.mxu0 0.0
  %1180 = vmatpush1.msra.mxu0 %v1046
  %1181 = vmatprep.subr.mxu0 0.0
  %1182 = vmatpush1.msra.mxu0 %v1048
  %1183 = vmatprep.subr.mxu0 0.0
  %1184 = vmatpush1.msra.mxu0 %v1050
  %1185 = vmatprep.subr.mxu0 0.0
  %1186 = vmatpush1.msra.mxu0 %v1052
  %1187 = vmatprep.subr.mxu0 0.0
  %1188 = vmatpush1.msra.mxu0 %v1054
  %1189 = vmatprep.subr.mxu0 0.0
  %1190 = vmatpush1.msra.mxu0 %v1056
  %1191 = vmatprep.subr.mxu0 0.0
  %1192 = vmatpush1.msra.mxu0 %v1058
  %1193 = vmatprep.subr.mxu0 0.0
  %1194 = vmatpush1.msra.mxu0 %v1060
  %1195 = vmatprep.mubr.f32.mxu0 %v995
  %1196 = vmatmul.mubr.f32.gmra.mrb[0].mxu0 %v985
  %v1197 = vpop.f32.mrb[0].mxu0
  %v1198 = vadd.f32 %v991, %v1197
  %v1199 = vpop.f32.mrb[0].mxu0
  %1200 = vdwg.mxu0
  %1201 = vmatprep.subr.mxu0 0.0
  %1202 = vmatpush1.msra.mxu0 %v1062
  %1203 = vmatprep.subr.mxu0 0.0
  %1204 = vmatpush1.msra.mxu0 %v1064
  %1205 = vmatprep.subr.mxu0 0.0
  %1206 = vmatpush1.msra.mxu0 %v1066
  %1207 = vmatprep.subr.mxu0 0.0
  %1208 = vmatpush1.msra.mxu0 %v1068
  %1209 = vmatprep.subr.mxu0 0.0
  %1210 = vmatpush1.msra.mxu0 %v1070
  %1211 = vmatprep.subr.mxu0 0.0
  %1212 = vmatpush1.msra.mxu0 %v1072
  %1213 = vmatprep.subr.mxu0 0.0
  %1214 = vmatpush1.msra.mxu0 %v1074
  %1215 = vmatprep.subr.mxu0 0.0
  %1216 = vmatpush1.msra.mxu0 %v1076
  %1217 = vmatprep.subr.mxu0 0.0
  %1218 = vmatpush1.msra.mxu0 %v1078
  %1219 = vmatprep.subr.mxu0 0.0
  %1220 = vmatpush1.msra.mxu0 %v1080
  %1221 = vmatprep.subr.mxu0 0.0
  %1222 = vmatpush1.msra.mxu0 %v1082
  %1223 = vmatprep.subr.mxu0 0.0
  %1224 = vmatpush1.msra.mxu0 %v1084
  %1225 = vmatprep.subr.mxu0 0.0
  %1226 = vmatpush1.msra.mxu0 0.0
  %1227 = vmatprep.subr.mxu0 0.0
  %1228 = vmatpush1.msra.mxu0 0.0
  %1229 = vmatprep.subr.mxu0 0.0
  %1230 = vmatpush1.msra.mxu0 0.0
  %1231 = vmatprep.subr.mxu0 0.0
  %1232 = vmatpush1.msra.mxu0 0.0
  %1233 = vmatprep.subr.mxu0 0.0
  %1234 = vmatpush1.msra.mxu0 0.0
  %1235 = vmatprep.subr.mxu0 0.0
  %1236 = vmatpush1.msra.mxu0 0.0
  %1237 = vmatprep.subr.mxu0 0.0
  %1238 = vmatpush1.msra.mxu0 0.0
  %1239 = vmatprep.subr.mxu0 0.0
  %1240 = vmatpush1.msra.mxu0 0.0
  %1241 = vmatprep.subr.mxu0 0.0
  %1242 = vmatpush1.msra.mxu0 0.0
  %1243 = vmatprep.subr.mxu0 0.0
  %1244 = vmatpush1.msra.mxu0 0.0
  %1245 = vmatprep.subr.mxu0 0.0
  %1246 = vmatpush1.msra.mxu0 0.0
  %1247 = vmatprep.subr.mxu0 0.0
  %1248 = vmatpush1.msra.mxu0 0.0
  %1249 = vmatprep.subr.mxu0 0.0
  %1250 = vmatpush1.msra.mxu0 0.0
  %1251 = vmatprep.subr.mxu0 0.0
  %1252 = vmatpush1.msra.mxu0 0.0
  %1253 = vmatprep.subr.mxu0 0.0
  %1254 = vmatpush1.msra.mxu0 0.0
  %1255 = vmatprep.subr.mxu0 0.0
  %1256 = vmatpush1.msra.mxu0 0.0
  %1257 = vmatprep.subr.mxu0 0.0
  %1258 = vmatpush1.msra.mxu0 0.0
  %1259 = vmatprep.subr.mxu0 0.0
  %1260 = vmatpush1.msra.mxu0 0.0
  %1261 = vmatprep.subr.mxu0 0.0
  %1262 = vmatpush1.msra.mxu0 0.0
  %1263 = vmatprep.subr.mxu0 0.0
  %1264 = vmatpush1.msra.mxu0 0.0
  %1265 = vmatprep.mubr.f32.mxu0 0.0
  %1266 = vmatmul.mubr.f32.gmra.mrb[0].mxu0 %v1129
  %v1267 = vpop.f32.mrb[0].mxu0
  %v1268 = vadd.f32 %v1198, %v1267
  %v1269 = vpop.f32.mrb[0].mxu0
  %1270 = vdwg.mxu0
  %v1271 = vld [vmem:[%s10] sm:$0xf]
  %vm1272 = vcmask 261120
  %v1274 = vsel %vm1272, %v1271, 0
  %1276 = vmatprep.subr.mxu0 %v826
  %1277 = vmatpush1.msra.mxu0 %v825
  %1278 = vmatprep.subr.mxu0 %v828
  %1279 = vmatpush1.msra.mxu0 %v827
  %1280 = vmatprep.subr.mxu0 %v830
  %1281 = vmatpush1.msra.mxu0 %v829
  %1282 = vmatprep.subr.mxu0 %v832
  %1283 = vmatpush1.msra.mxu0 %v831
  %1284 = vmatprep.subr.mxu0 0.0
  %1285 = vmatpush1.msra.mxu0 0.0
  %1286 = vmatprep.subr.mxu0 0.0
  %1287 = vmatpush1.msra.mxu0 0.0
  %1288 = vmatprep.subr.mxu0 0.0
  %1289 = vmatpush1.msra.mxu0 0.0
  %1290 = vmatprep.subr.mxu0 0.0
  %1291 = vmatpush1.msra.mxu0 0.0
  %1292 = vmatprep.subr.mxu0 0.0
  %1293 = vmatpush1.msra.mxu0 0.0
  %1294 = vmatprep.subr.mxu0 0.0
  %1295 = vmatpush1.msra.mxu0 0.0
  %1296 = vmatprep.subr.mxu0 0.0
  %1297 = vmatpush1.msra.mxu0 0.0
  %1298 = vmatprep.subr.mxu0 0.0
  %1299 = vmatpush1.msra.mxu0 0.0
  %1300 = vmatprep.subr.mxu0 0.0
  %1301 = vmatpush1.msra.mxu0 0.0
  %1302 = vmatprep.subr.mxu0 0.0
  %1303 = vmatpush1.msra.mxu0 0.0
  %1304 = vmatprep.subr.mxu0 0.0
  %1305 = vmatpush1.msra.mxu0 0.0
  %1306 = vmatprep.subr.mxu0 0.0
  %1307 = vmatpush1.msra.mxu0 0.0
  %1308 = vmatprep.subr.mxu0 0.0
  %1309 = vmatpush1.msra.mxu0 0.0
  %1310 = vmatprep.subr.mxu0 0.0
  %1311 = vmatpush1.msra.mxu0 0.0
  %1312 = vmatprep.subr.mxu0 0.0
  %1313 = vmatpush1.msra.mxu0 0.0
  %1314 = vmatprep.subr.mxu0 0.0
  %1315 = vmatpush1.msra.mxu0 0.0
  %1316 = vmatprep.subr.mxu0 0.0
  %1317 = vmatpush1.msra.mxu0 0.0
  %1318 = vmatprep.subr.mxu0 0.0
  %1319 = vmatpush1.msra.mxu0 0.0
  %1320 = vmatprep.subr.mxu0 0.0
  %1321 = vmatpush1.msra.mxu0 0.0
  %1322 = vmatprep.subr.mxu0 0.0
  %1323 = vmatpush1.msra.mxu0 0.0
  %1324 = vmatprep.subr.mxu0 0.0
  %1325 = vmatpush1.msra.mxu0 0.0
  %1326 = vmatprep.subr.mxu0 0.0
  %1327 = vmatpush1.msra.mxu0 0.0
  %1328 = vmatprep.subr.mxu0 0.0
  %1329 = vmatpush1.msra.mxu0 0.0
  %1330 = vmatprep.subr.mxu0 0.0
  %1331 = vmatpush1.msra.mxu0 0.0
  %1332 = vmatprep.subr.mxu0 0.0
  %1333 = vmatpush1.msra.mxu0 0.0
  %1334 = vmatprep.subr.mxu0 0.0
  %1335 = vmatpush1.msra.mxu0 0.0
  %1336 = vmatprep.subr.mxu0 0.0
  %1337 = vmatpush1.msra.mxu0 0.0
  %1338 = vmatprep.subr.mxu0 0.0
  %1339 = vmatpush1.msra.mxu0 0.0
  %1340 = vmatprep.mubr.f32.mxu0 0.0
  %1341 = vmatmul.mubr.f32.gmra.mrb[0].mxu0 %v1274
  %v1342 = vpop.f32.mrb[0].mxu0
  %v1343 = vadd.f32 0.0, %v1342
  %v1344 = vpop.f32.mrb[0].mxu0
  %v1345 = vadd.f32 0.0, %v1344
  %1346 = vdwg.mxu0
  %1348 = vrot.lane.b32.xlu0 %v1343, 117
  %v1349 = vpop.permute.xlu0 %1348
  %vm1351 = vcmask 404480
  %v1352 = vsel %vm1351, %v1349, 0.0
  %1353 = vadd.xlane.f32.xlu0 %v1352
  %v1354 = vpop.xlane.xlu0 %1353
  %1356 = vrot.lane.b32.xlu0 %v1343, 45
  %v1357 = vpop.permute.xlu0 %1356
  %1358 = vrot.lane.b32.xlu0 %v1345, 45
  %v1359 = vpop.permute.xlu0 %1358
  %vm1360 = vcmask 367616
  %v1361 = vsel %vm1360, %v1357, %v1359
  %v1363 = vsel %vm1351, %v1361, 0.0
  %1364 = vadd.xlane.f32.xlu0 %v1363
  %v1365 = vpop.xlane.xlu0 %1364
  %vm1366 = vcmask 7168
  %v1367 = vsel %vm1366, %v1354, %v1365
  %v1368 = vmul.f32 %v1367, 0.02
  %v1369 = vld [vmem:[%s11] sm:$0xf]
  %1371 = vset.pattern.permute.xlu0 0
  %1372 = vperm.xlu0 %1371, %v1369
  %v1373 = vpop.permute.xlu0 %1372
  %v1375 = vadd.f32 %v1368, %v1373
  %1377 = vrot.lane.b32.xlu0 %v1375, 112
  %v1378 = vpop.permute.xlu0 %1377
  %vm1380 = vcmask 916480
  %v1381 = vsel %vm1380, %v1268, %v1378
  %vm1382 = vcmask 932864
  %v1383 = vsel %vm1382, %v1381, 0.0
  %v1384 = vsel %vm70, %v1383, 0.0
  %1385 = vst [vmem:[%s12] sm:$0xff] %v1384
  // Predicated region
  $region50: #{forward.1} parent=0 // pred_check
    _
  $region51: #{forward.1} parent=0 // pred_check_branch
    %1387 = sbr.rel (0) target = $region53
  $region52: #{forward.1} parent=0 // pred_region
    _
  $region53: #{forward.1} parent=0 // pred_fallthru
    _
  // Predicated region
  $region54: #{forward.1} parent=0 // pred_check
    _
  $region55: #{forward.1} parent=0 // pred_check_branch
    %1389 = sbr.rel (0) target = $region57
  $region56: #{forward.1} parent=0 // pred_region
    _
  $region57: #{forward.1} parent=0 // pred_fallthru
    _

</llo_original>
